<compile_context>
chip_gen: v7x
topology: tpu7x:2x2x1
jax: 0.10.0
libtpu: 0.0.40
codegen_flags: <defaults>
</compile_context>

<pallas_src>
import functools

import numpy as np
import jax
import jax.numpy as jnp
from jax.experimental import pallas as pl
from jax.experimental.pallas import tpu as pltpu

NUM_STATES = 64
GAMMA_M0 = 0.5
GAMMA_T = 0.99999
PLASTICITY_CLAMP = 10.0           # Clamp(floor=-10, ceil=10)
NUM_RESOLVENT_DOUBLINGS = 8       # resolvent = sum_{k < 2**8} (gamma*J^T)^k
MAX_BLOCK_B = 512                 # rows per grid step; (512,64)+(512,64) f32 << VMEM on all gens


# ---------------------------------------------------------------------------
# One-shot kernel:  Rt = sum_{k<2^d} A^k   with  A = gamma * J^T.
# Log-depth product form (I+A)(I+A^2)(I+A^4)...; runs ONCE per (J, gamma) change,
# not per forward call.  2*(d-1) = 14 tiny 64x64 MXU matmuls.
# ---------------------------------------------------------------------------
def _resolvent_kernel(a_ref, out_ref, *, num_doublings):
    S = a_ref.shape[0]
    a = a_ref[...]
    row = jax.lax.broadcasted_iota(jnp.int32, (S, S), 0)
    col = jax.lax.broadcasted_iota(jnp.int32, (S, S), 1)
    eye = (row == col).astype(jnp.float32)
    s = eye + a                      # sum_{k<2}
    p = a
    for _ in range(num_doublings - 1):
        p = jnp.dot(p, p, preferred_element_type=jnp.float32)
        s = s + jnp.dot(s, p, preferred_element_type=jnp.float32)
    out_ref[...] = s


@functools.partial(jax.jit, static_argnames=("num_doublings",))
def _compute_resolvent(J, gamma, *, num_doublings=NUM_RESOLVENT_DOUBLINGS):
    S = J.shape[0]
    A = (gamma * J).T                # gamma folded once in XLA; one cheap 64x64 transpose
    return pl.pallas_call(
        functools.partial(_resolvent_kernel, num_doublings=num_doublings),
        out_shape=jax.ShapeDtypeStruct((S, S), jnp.float32),
    )(A)


# ---------------------------------------------------------------------------
# Per-call kernel: activity = x @ Rt   (row b:  pinv(I - gamma*J) @ x_b).
# Single lane-dense MXU matmul per (block_b, 64) block; memory-bound.
# ---------------------------------------------------------------------------
def _apply_resolvent_kernel(x_ref, rt_ref, out_ref):
    out_ref[...] = jnp.dot(x_ref[...], rt_ref[...],
                           preferred_element_type=jnp.float32)


def _round_up(n, m):
    return ((n + m - 1) // m) * m


def _plan_batch(B):
    """Return (block_b, padded_B).  Big blocks amortize the ~0.35us/step pipeline
    overhead; for B > 8 keep grid >= 2 so the "parallel" batch axis can shard across
    v7x's two TensorCores."""
    if B <= 8:
        return 8, 8
    B8 = _round_up(B, 8)
    blk = min(MAX_BLOCK_B, max(8, ((B8 // 2) // 8) * 8))
    return blk, _round_up(B8, blk)


@functools.partial(jax.jit, static_argnames=("block_b", "b_pad"))
def _recurrent_apply(x_batch, Rt, *, block_b, b_pad):
    B, S = x_batch.shape
    if b_pad != B:
        x_batch = jnp.concatenate(
            [x_batch, jnp.zeros((b_pad - B, S), jnp.float32)], axis=0)
    out = pl.pallas_call(
        _apply_resolvent_kernel,
        out_shape=jax.ShapeDtypeStruct((b_pad, S), jnp.float32),
        grid_spec=pltpu.PrefetchScalarGridSpec(
            num_scalar_prefetch=0,
            grid=(b_pad // block_b,),
            in_specs=[pl.BlockSpec((block_b, S), lambda i: (i, 0)),
                      pl.BlockSpec((S, S), lambda i: (0, 0))],
            out_specs=pl.BlockSpec((block_b, S), lambda i: (i, 0))),
        compiler_params=pltpu.CompilerParams(
            dimension_semantics=("parallel",)),
    )(x_batch, Rt)
    return out[:B]


@jax.jit
def _clamp_and_shift(queue, activity):
    clamped = jnp.clip(activity, -PLASTICITY_CLAMP, PLASTICITY_CLAMP)
    # Time-ordered queue (newest at column -1) matching the module's stored state.
    # TODO(synk): a circular write pointer would avoid copying the (S, 20) buffer,
    # but changes the observable x_queue layout that update() relies on.
    new_queue = jnp.concatenate([queue[:, 1:], clamped[:, None]], axis=1)
    return clamped, new_queue


# ---------------------------------------------------------------------------
# Thin stateful wrapper mirroring STDP_CA3 (forward path only)
# ---------------------------------------------------------------------------
class STDPCA3Pallas:
    def __init__(self, num_states, gamma_M0, gamma_T=0.99999, key=None):
        self.num_states = num_states
        self.gamma_M0 = gamma_M0
        self.gamma_T = gamma_T
        self.x_queue_length = 20
        init_scale = 1e-4
        if key is None:
            key = jax.random.PRNGKey(0)
        # Module's reset() sets J = zeros; use a small deterministic random J so the
        # kernels exercise a non-trivial solve path (spectral_radius(gamma*J) << 1).
        self.J = 0.01 * jax.random.normal(key, (num_states, num_states), jnp.float32)
        self.eta_invs = jnp.ones((num_states,), jnp.float32) * init_scale
        self.B_pos = jnp.zeros((num_states,), jnp.float32)
        self.B_neg = jnp.zeros((num_states,), jnp.float32)
        self.B_norm = jnp.zeros((num_states,), jnp.float32)
        self.x_queue = jnp.zeros((num_states, self.x_queue_length), jnp.float32)
        self.prev_input = None
        self.curr_input = None
        self.X = None
        self.real_T_tilde = init_scale * self.J.T
        self.real_T_count = init_scale * jnp.ones((num_states,), jnp.float32)
        self.eta_inv_scale = 1  # use_kernels_in_update=False default
        self._resolvent_cache = {"key": None, "Rt": None}
        # TODO(synk): update() / STDP plasticity path is not implemented here.

    def get_T(self):
        return self.J.T

    def get_M_hat(self, gamma=None):
        # Reference/debug utility only — forward() never computes M_hat explicitly.
        # TODO(synk): torch.linalg.pinv (SVD) has no Pallas equivalent.
        if gamma is None:
            gamma = self.gamma_M0
        S = self.num_states
        return jnp.linalg.pinv(jnp.eye(S, dtype=jnp.float32) - gamma * self.J.T)

    def _get_resolvent(self, gamma):
        key = (id(self.J), float(gamma))
        if self._resolvent_cache["key"] != key:
            Rt = _compute_resolvent(self.J, jnp.float32(gamma))
            self._resolvent_cache = {"key": key, "Rt": Rt}
        return self._resolvent_cache["Rt"]

    def get_recurrent_output_batch(self, x_batch, gamma=None):
        """Batched recurrent output for B input rows (no state update)."""
        if gamma is None:
            gamma = self.gamma_M0
        x_batch = jnp.asarray(x_batch, jnp.float32)
        Rt = self._get_resolvent(gamma)
        block_b, b_pad = _plan_batch(x_batch.shape[0])
        return _recurrent_apply(x_batch, Rt, block_b=block_b, b_pad=b_pad)

    def forward(self, _input, update_transition=True, gamma=None):
        x = jnp.reshape(jnp.squeeze(jnp.asarray(_input, jnp.float32)),
                        (self.num_states,))
        if gamma is None:
            gamma = self.gamma_M0
        Rt = self._get_resolvent(gamma)
        activity = _recurrent_apply(x[None, :], Rt, block_b=8, b_pad=8)[0]
        if update_transition:
            self.prev_input = self.curr_input
            self.curr_input = x
            clamped, self.x_queue = _clamp_and_shift(self.x_queue, activity)
            self.X = clamped
        return activity

    __call__ = forward


if __name__ == "__main__":
    key = jax.random.PRNGKey(0)
    k1, k2, k3 = jax.random.split(key, 3)

    S = NUM_STATES
    model = STDPCA3Pallas(S, GAMMA_M0, GAMMA_T, key=k1)

    # Pure-JAX pinv reference (original module semantics).
    M_ref = jnp.linalg.pinv(jnp.eye(S, dtype=jnp.float32) - GAMMA_M0 * model.J.T)

    # ---- Batched recurrent output: ragged batch (pads to 16, grid of 2 blocks) ----
    B = 10
    xb = jax.random.uniform(k2, (B, S), dtype=jnp.float32)
    act_b = jax.block_until_ready(model.get_recurrent_output_batch(xb))
    ref_b = xb @ M_ref                      # row b: M_hat^T @ x_b
    assert act_b.shape == (B, S)
    assert np.allclose(np.asarray(act_b), np.asarray(ref_b), atol=1e-4, rtol=1e-4)

    # ---- Single-input forward with state update (module semantics) ----
    x1 = jax.random.uniform(k3, (1, S), dtype=jnp.float32)
    act1 = jax.block_until_ready(model.forward(x1))
    ref1 = M_ref.T @ jnp.squeeze(x1)
    assert np.allclose(np.asarray(act1), np.asarray(ref1), atol=1e-4, rtol=1e-4)
    assert model.X.shape == (S,)
    assert model.x_queue.shape == (S, model.x_queue_length)
    assert np.allclose(np.asarray(model.X),
                       np.clip(np.asarray(ref1), -PLASTICITY_CLAMP, PLASTICITY_CLAMP),
                       atol=1e-4)
    assert np.allclose(np.asarray(model.x_queue[:, -1]), np.asarray(model.X))

    print("KERNEL_OK")
</pallas_src>

<mosaic_0001>
module attributes {stable_mosaic.version = 11 : i64} {
  func.func @_resolvent_kernel(%arg0: memref<64x64xf32, #tpu.memory_space<vmem>>, %arg1: memref<64x64xf32, #tpu.memory_space<vmem>>) attributes {dimension_semantics = [], scalar_prefetch = 0 : i64, scratch_operands = 0 : i64, tpu.core_type = #tpu.core_type<tc>} {
    %c0 = arith.constant 0 : index
    %c0_0 = arith.constant 0 : index
    %0 = vector.load %arg0[%c0, %c0_0] : memref<64x64xf32, #tpu.memory_space<vmem>>, vector<64x64xf32>
    %1 = tpu.iota {dimensions = array<i32: 0>} : vector<64x64xi32>
    %2 = tpu.iota {dimensions = array<i32: 1>} : vector<64x64xi32>
    %3 = arith.cmpi eq, %1, %2 : vector<64x64xi32>
    %4 = arith.extui %3 : vector<64x64xi1> to vector<64x64xi32>
    %5 = arith.sitofp %4 : vector<64x64xi32> to vector<64x64xf32>
    %6 = arith.addf %5, %0 : vector<64x64xf32>
    %cst = arith.constant dense<0.000000e+00> : vector<64x64xf32>
    %7 = tpu.matmul %0, %0, %cst {dimension_numbers = #tpu.dot_dimension_numbers<[1], [0], [0], [1], [0, 0, 1, 1], [], []>} : vector<64x64xf32>, vector<64x64xf32>, vector<64x64xf32> -> vector<64x64xf32>
    %cst_1 = arith.constant dense<0.000000e+00> : vector<64x64xf32>
    %8 = tpu.matmul %6, %7, %cst_1 {dimension_numbers = #tpu.dot_dimension_numbers<[1], [0], [0], [1], [0, 0, 1, 1], [], []>} : vector<64x64xf32>, vector<64x64xf32>, vector<64x64xf32> -> vector<64x64xf32>
    %9 = arith.addf %6, %8 : vector<64x64xf32>
    %cst_2 = arith.constant dense<0.000000e+00> : vector<64x64xf32>
    %10 = tpu.matmul %7, %7, %cst_2 {dimension_numbers = #tpu.dot_dimension_numbers<[1], [0], [0], [1], [0, 0, 1, 1], [], []>} : vector<64x64xf32>, vector<64x64xf32>, vector<64x64xf32> -> vector<64x64xf32>
    %cst_3 = arith.constant dense<0.000000e+00> : vector<64x64xf32>
    %11 = tpu.matmul %9, %10, %cst_3 {dimension_numbers = #tpu.dot_dimension_numbers<[1], [0], [0], [1], [0, 0, 1, 1], [], []>} : vector<64x64xf32>, vector<64x64xf32>, vector<64x64xf32> -> vector<64x64xf32>
    %12 = arith.addf %9, %11 : vector<64x64xf32>
    %cst_4 = arith.constant dense<0.000000e+00> : vector<64x64xf32>
    %13 = tpu.matmul %10, %10, %cst_4 {dimension_numbers = #tpu.dot_dimension_numbers<[1], [0], [0], [1], [0, 0, 1, 1], [], []>} : vector<64x64xf32>, vector<64x64xf32>, vector<64x64xf32> -> vector<64x64xf32>
    %cst_5 = arith.constant dense<0.000000e+00> : vector<64x64xf32>
    %14 = tpu.matmul %12, %13, %cst_5 {dimension_numbers = #tpu.dot_dimension_numbers<[1], [0], [0], [1], [0, 0, 1, 1], [], []>} : vector<64x64xf32>, vector<64x64xf32>, vector<64x64xf32> -> vector<64x64xf32>
    %15 = arith.addf %12, %14 : vector<64x64xf32>
    %cst_6 = arith.constant dense<0.000000e+00> : vector<64x64xf32>
    %16 = tpu.matmul %13, %13, %cst_6 {dimension_numbers = #tpu.dot_dimension_numbers<[1], [0], [0], [1], [0, 0, 1, 1], [], []>} : vector<64x64xf32>, vector<64x64xf32>, vector<64x64xf32> -> vector<64x64xf32>
    %cst_7 = arith.constant dense<0.000000e+00> : vector<64x64xf32>
    %17 = tpu.matmul %15, %16, %cst_7 {dimension_numbers = #tpu.dot_dimension_numbers<[1], [0], [0], [1], [0, 0, 1, 1], [], []>} : vector<64x64xf32>, vector<64x64xf32>, vector<64x64xf32> -> vector<64x64xf32>
    %18 = arith.addf %15, %17 : vector<64x64xf32>
    %cst_8 = arith.constant dense<0.000000e+00> : vector<64x64xf32>
    %19 = tpu.matmul %16, %16, %cst_8 {dimension_numbers = #tpu.dot_dimension_numbers<[1], [0], [0], [1], [0, 0, 1, 1], [], []>} : vector<64x64xf32>, vector<64x64xf32>, vector<64x64xf32> -> vector<64x64xf32>
    %cst_9 = arith.constant dense<0.000000e+00> : vector<64x64xf32>
    %20 = tpu.matmul %18, %19, %cst_9 {dimension_numbers = #tpu.dot_dimension_numbers<[1], [0], [0], [1], [0, 0, 1, 1], [], []>} : vector<64x64xf32>, vector<64x64xf32>, vector<64x64xf32> -> vector<64x64xf32>
    %21 = arith.addf %18, %20 : vector<64x64xf32>
    %cst_10 = arith.constant dense<0.000000e+00> : vector<64x64xf32>
    %22 = tpu.matmul %19, %19, %cst_10 {dimension_numbers = #tpu.dot_dimension_numbers<[1], [0], [0], [1], [0, 0, 1, 1], [], []>} : vector<64x64xf32>, vector<64x64xf32>, vector<64x64xf32> -> vector<64x64xf32>
    %cst_11 = arith.constant dense<0.000000e+00> : vector<64x64xf32>
    %23 = tpu.matmul %21, %22, %cst_11 {dimension_numbers = #tpu.dot_dimension_numbers<[1], [0], [0], [1], [0, 0, 1, 1], [], []>} : vector<64x64xf32>, vector<64x64xf32>, vector<64x64xf32> -> vector<64x64xf32>
    %24 = arith.addf %21, %23 : vector<64x64xf32>
    %cst_12 = arith.constant dense<0.000000e+00> : vector<64x64xf32>
    %25 = tpu.matmul %22, %22, %cst_12 {dimension_numbers = #tpu.dot_dimension_numbers<[1], [0], [0], [1], [0, 0, 1, 1], [], []>} : vector<64x64xf32>, vector<64x64xf32>, vector<64x64xf32> -> vector<64x64xf32>
    %cst_13 = arith.constant dense<0.000000e+00> : vector<64x64xf32>
    %26 = tpu.matmul %24, %25, %cst_13 {dimension_numbers = #tpu.dot_dimension_numbers<[1], [0], [0], [1], [0, 0, 1, 1], [], []>} : vector<64x64xf32>, vector<64x64xf32>, vector<64x64xf32> -> vector<64x64xf32>
    %27 = arith.addf %24, %26 : vector<64x64xf32>
    %c0_14 = arith.constant 0 : index
    %c0_15 = arith.constant 0 : index
    %28 = vector.load %arg1[%c0_14, %c0_15] : memref<64x64xf32, #tpu.memory_space<vmem>>, vector<64x64xf32>
    tpu.vector_store %arg1[%c0_14, %c0_15], %27 {strides = array<i32>} : memref<64x64xf32, #tpu.memory_space<vmem>>, vector<64x64xf32>,
    return
  }
}

</mosaic_0001>

<llo_original>
// kernel: _compute_resolvent.1
$region0: #{_compute_resolvent.1}
  #allocation0 [shape = 'u32[]', space=smem, size = 0x4, offset = 0x4, fixed_abs, tag = 'smem constant byte address 0x4 - core index']
  #allocation1 [shape = 'u32[144,128]{1,0:T(1,128)}', space=vmem, size = 0x12000, scoped, tag = 'internal scratch']
  %s0 = inlined_call_operand.vmem [shape: f32[64,64], index: 0, kind: input, shape index: {}]
  %s1 = inlined_call_operand.hbm [shape: f32[64,64], index: 1, kind: output, shape index: {}]
  %s2 = sld [smem:[#allocation0]]
  $region14: #{_compute_resolvent.1} parent=0
    _
  %s4 = ssub.s32 1, %s2
  %s5 = scalar_select 0, %s4, %s2
  $region1: #{_compute_resolvent.1} parent=0
    #allocation2 [shape = 'u8[32768]{0}', space=vmem, size = 0x8000, scoped, tag = 'output window, operand 0, single buffered']
    #allocation3 [shape = 's32[1]{0}', space=sflag, size = 0x4, scoped, tag = 'scoped memory for _compute_resolvent.1']
    %6 = vsyncpa [#allocation3], 0
    // Predicated region
    $region2: #{_compute_resolvent.1} parent=1 // pred_check
      _
    $region3: #{_compute_resolvent.1} parent=1 // pred_check_branch
      %8 = sbr.rel (0) target = $region5
    $region4: #{_compute_resolvent.1} parent=1 // pred_region
      _
    $region5: #{_compute_resolvent.1} parent=1 // pred_fallthru
      _
    %v9 = vld [vmem:[%s0] sm:$0xff]
    %v10 = vld [vmem:[%s0 + $0x8] sm:$0xff]
    %v11 = vld [vmem:[%s0 + $0x10] sm:$0xff]
    %v12 = vld [vmem:[%s0 + $0x18] sm:$0xff]
    %v13 = vld [vmem:[%s0 + $0x20] sm:$0xff]
    %v14 = vld [vmem:[%s0 + $0x28] sm:$0xff]
    %v15 = vld [vmem:[%s0 + $0x30] sm:$0xff]
    %v16 = vld [vmem:[%s0 + $0x38] sm:$0xff]
    %v17 = vlaneseq
    %v18 = vshrl.u32 %v17, 7
    %v19 = vadd.s32 %v18, 8
    %v20 = vadd.s32 %v18, 16
    %v21 = vadd.s32 %v18, 24
    %v22 = vadd.s32 %v18, 32
    %v23 = vadd.s32 %v18, 40
    %v24 = vadd.s32 %v18, 48
    %v25 = vadd.s32 %v18, 56
    %v26 = vlaneseq
    %v27 = vand.u32 %v26, 127
    %vm28 = vcmp.eq.s32.totalorder %v18, %v27
    %vm29 = vcmp.eq.s32.totalorder %v19, %v27
    %vm30 = vcmp.eq.s32.totalorder %v20, %v27
    %vm31 = vcmp.eq.s32.totalorder %v21, %v27
    %vm32 = vcmp.eq.s32.totalorder %v22, %v27
    %vm33 = vcmp.eq.s32.totalorder %v23, %v27
    %vm34 = vcmp.eq.s32.totalorder %v24, %v27
    %vm35 = vcmp.eq.s32.totalorder %v25, %v27
    %v36 = vsel %vm28, 1, 0
    %v37 = vsel %vm29, 1, 0
    %v38 = vsel %vm30, 1, 0
    %v39 = vsel %vm31, 1, 0
    %v40 = vsel %vm32, 1, 0
    %v41 = vsel %vm33, 1, 0
    %v42 = vsel %vm34, 1, 0
    %v43 = vsel %vm35, 1, 0
    %v44 = vcvt.s32.f32 %v36
    %v45 = vcvt.s32.f32 %v37
    %v46 = vcvt.s32.f32 %v38
    %v47 = vcvt.s32.f32 %v39
    %v48 = vcvt.s32.f32 %v40
    %v49 = vcvt.s32.f32 %v41
    %v50 = vcvt.s32.f32 %v42
    %v51 = vcvt.s32.f32 %v43
    %v52 = vadd.f32 %v44, %v9
    %v53 = vadd.f32 %v45, %v10
    %v54 = vadd.f32 %v46, %v11
    %v55 = vadd.f32 %v47, %v12
    %v56 = vadd.f32 %v48, %v13
    %v57 = vadd.f32 %v49, %v14
    %v58 = vadd.f32 %v50, %v15
    %v59 = vadd.f32 %v51, %v16
    %vm60 = vcmask 523264
    %v62 = vsel %vm60, %v9, 0
    %v65 = vsel %vm60, %v10, 0
    %v68 = vsel %vm60, %v11, 0
    %v71 = vsel %vm60, %v12, 0
    %v74 = vsel %vm60, %v13, 0
    %v77 = vsel %vm60, %v14, 0
    %v80 = vsel %vm60, %v15, 0
    %v83 = vsel %vm60, %v16, 0
    %85 = vmatprep.subr.mxu0 0.0
    %86 = vmatpush1.msra.mxu0 %v9
    %87 = vmatprep.subr.mxu0 0.0
    %88 = vmatpush1.msra.mxu0 %v10
    %89 = vmatprep.subr.mxu0 0.0
    %90 = vmatpush1.msra.mxu0 %v11
    %91 = vmatprep.subr.mxu0 0.0
    %92 = vmatpush1.msra.mxu0 %v12
    %93 = vmatprep.subr.mxu0 0.0
    %94 = vmatpush1.msra.mxu0 %v13
    %95 = vmatprep.subr.mxu0 0.0
    %96 = vmatpush1.msra.mxu0 %v14
    %97 = vmatprep.subr.mxu0 0.0
    %98 = vmatpush1.msra.mxu0 %v15
    %99 = vmatprep.subr.mxu0 0.0
    %100 = vmatpush1.msra.mxu0 %v16
    %101 = vmatprep.subr.mxu0 0.0
    %102 = vmatpush1.msra.mxu0 0.0
    %103 = vmatprep.subr.mxu0 0.0
    %104 = vmatpush1.msra.mxu0 0.0
    %105 = vmatprep.subr.mxu0 0.0
    %106 = vmatpush1.msra.mxu0 0.0
    %107 = vmatprep.subr.mxu0 0.0
    %108 = vmatpush1.msra.mxu0 0.0
    %109 = vmatprep.subr.mxu0 0.0
    %110 = vmatpush1.msra.mxu0 0.0
    %111 = vmatprep.subr.mxu0 0.0
    %112 = vmatpush1.msra.mxu0 0.0
    %113 = vmatprep.subr.mxu0 0.0
    %114 = vmatpush1.msra.mxu0 0.0
    %115 = vmatprep.subr.mxu0 0.0
    %116 = vmatpush1.msra.mxu0 0.0
    %117 = vmatprep.subr.mxu0 0.0
    %118 = vmatpush1.msra.mxu0 0.0
    %119 = vmatprep.subr.mxu0 0.0
    %120 = vmatpush1.msra.mxu0 0.0
    %121 = vmatprep.subr.mxu0 0.0
    %122 = vmatpush1.msra.mxu0 0.0
    %123 = vmatprep.subr.mxu0 0.0
    %124 = vmatpush1.msra.mxu0 0.0
    %125 = vmatprep.subr.mxu0 0.0
    %126 = vmatpush1.msra.mxu0 0.0
    %127 = vmatprep.subr.mxu0 0.0
    %128 = vmatpush1.msra.mxu0 0.0
    %129 = vmatprep.subr.mxu0 0.0
    %130 = vmatpush1.msra.mxu0 0.0
    %131 = vmatprep.subr.mxu0 0.0
    %132 = vmatpush1.msra.mxu0 0.0
    %133 = vmatprep.subr.mxu0 0.0
    %134 = vmatpush1.msra.mxu0 0.0
    %135 = vmatprep.subr.mxu0 0.0
    %136 = vmatpush1.msra.mxu0 0.0
    %137 = vmatprep.subr.mxu0 0.0
    %138 = vmatpush1.msra.mxu0 0.0
    %139 = vmatprep.subr.mxu0 0.0
    %140 = vmatpush1.msra.mxu0 0.0
    %141 = vmatprep.subr.mxu0 0.0
    %142 = vmatpush1.msra.mxu0 0.0
    %143 = vmatprep.subr.mxu0 0.0
    %144 = vmatpush1.msra.mxu0 0.0
    %145 = vmatprep.subr.mxu0 0.0
    %146 = vmatpush1.msra.mxu0 0.0
    %147 = vmatprep.subr.mxu0 0.0
    %148 = vmatpush1.msra.mxu0 0.0
    %149 = vmatprep.mubr.f32.mxu0 0.0
    %150 = vmatmul.mubr.f32.gmra.mrb[0].mxu0 %v62
    %v151 = vpop.f32.mrb[0].mxu0
    %v152 = vadd.f32 0.0, %v151
    %v153 = vpop.f32.mrb[0].mxu0
    %154 = vmatprep.mubr.f32.mxu0 0.0
    %155 = vmatmul.mubr.f32.gmra.mrb[0].mxu0 %v65
    %v156 = vpop.f32.mrb[0].mxu0
    %v157 = vadd.f32 0.0, %v156
    %v158 = vpop.f32.mrb[0].mxu0
    %159 = vmatprep.mubr.f32.mxu0 0.0
    %160 = vmatmul.mubr.f32.gmra.mrb[0].mxu0 %v68
    %v161 = vpop.f32.mrb[0].mxu0
    %v162 = vadd.f32 0.0, %v161
    %v163 = vpop.f32.mrb[0].mxu0
    %164 = vmatprep.mubr.f32.mxu0 0.0
    %165 = vmatmul.mubr.f32.gmra.mrb[0].mxu0 %v71
    %v166 = vpop.f32.mrb[0].mxu0
    %v167 = vadd.f32 0.0, %v166
    %v168 = vpop.f32.mrb[0].mxu0
    %169 = vmatprep.mubr.f32.mxu0 0.0
    %170 = vmatmul.mubr.f32.gmra.mrb[0].mxu0 %v74
    %v171 = vpop.f32.mrb[0].mxu0
    %v172 = vadd.f32 0.0, %v171
    %v173 = vpop.f32.mrb[0].mxu0
    %174 = vmatprep.mubr.f32.mxu0 0.0
    %175 = vmatmul.mubr.f32.gmra.mrb[0].mxu0 %v77
    %v176 = vpop.f32.mrb[0].mxu0
    %v177 = vadd.f32 0.0, %v176
    %v178 = vpop.f32.mrb[0].mxu0
    %179 = vmatprep.mubr.f32.mxu0 0.0
    %180 = vmatmul.mubr.f32.gmra.mrb[0].mxu0 %v80
    %v181 = vpop.f32.mrb[0].mxu0
    %v182 = vadd.f32 0.0, %v181
    %v183 = vpop.f32.mrb[0].mxu0
    %184 = vmatprep.mubr.f32.mxu0 0.0
    %185 = vmatmul.mubr.f32.gmra.mrb[0].mxu0 %v83
    %v186 = vpop.f32.mrb[0].mxu0
    %v187 = vadd.f32 0.0, %v186
    %v188 = vpop.f32.mrb[0].mxu0
    %189 = vdwg.mxu0
    %v191 = vsel %vm60, %v52, 0
    %v194 = vsel %vm60, %v53, 0
    %v197 = vsel %vm60, %v54, 0
    %v200 = vsel %vm60, %v55, 0
    %v203 = vsel %vm60, %v56, 0
    %v206 = vsel %vm60, %v57, 0
    %v209 = vsel %vm60, %v58, 0
    %v212 = vsel %vm60, %v59, 0
    %214 = vmatprep.subr.mxu0 0.0
    %215 = vmatpush1.msra.mxu0 %v152
    %216 = vmatprep.subr.mxu0 0.0
    %217 = vmatpush1.msra.mxu0 %v157
    %218 = vmatprep.subr.mxu0 0.0
    %219 = vmatpush1.msra.mxu0 %v162
    %220 = vmatprep.subr.mxu0 0.0
    %221 = vmatpush1.msra.mxu0 %v167
    %222 = vmatprep.subr.mxu0 0.0
    %223 = vmatpush1.msra.mxu0 %v172
    %224 = vmatprep.subr.mxu0 0.0
    %225 = vmatpush1.msra.mxu0 %v177
    %226 = vmatprep.subr.mxu0 0.0
    %227 = vmatpush1.msra.mxu0 %v182
    %228 = vmatprep.subr.mxu0 0.0
    %229 = vmatpush1.msra.mxu0 %v187
    %230 = vmatprep.subr.mxu0 0.0
    %231 = vmatpush1.msra.mxu0 0.0
    %232 = vmatprep.subr.mxu0 0.0
    %233 = vmatpush1.msra.mxu0 0.0
    %234 = vmatprep.subr.mxu0 0.0
    %235 = vmatpush1.msra.mxu0 0.0
    %236 = vmatprep.subr.mxu0 0.0
    %237 = vmatpush1.msra.mxu0 0.0
    %238 = vmatprep.subr.mxu0 0.0
    %239 = vmatpush1.msra.mxu0 0.0
    %240 = vmatprep.subr.mxu0 0.0
    %241 = vmatpush1.msra.mxu0 0.0
    %242 = vmatprep.subr.mxu0 0.0
    %243 = vmatpush1.msra.mxu0 0.0
    %244 = vmatprep.subr.mxu0 0.0
    %245 = vmatpush1.msra.mxu0 0.0
    %246 = vmatprep.subr.mxu0 0.0
    %247 = vmatpush1.msra.mxu0 0.0
    %248 = vmatprep.subr.mxu0 0.0
    %249 = vmatpush1.msra.mxu0 0.0
    %250 = vmatprep.subr.mxu0 0.0
    %251 = vmatpush1.msra.mxu0 0.0
    %252 = vmatprep.subr.mxu0 0.0
    %253 = vmatpush1.msra.mxu0 0.0
    %254 = vmatprep.subr.mxu0 0.0
    %255 = vmatpush1.msra.mxu0 0.0
    %256 = vmatprep.subr.mxu0 0.0
    %257 = vmatpush1.msra.mxu0 0.0
    %258 = vmatprep.subr.mxu0 0.0
    %259 = vmatpush1.msra.mxu0 0.0
    %260 = vmatprep.subr.mxu0 0.0
    %261 = vmatpush1.msra.mxu0 0.0
    %262 = vmatprep.subr.mxu0 0.0
    %263 = vmatpush1.msra.mxu0 0.0
    %264 = vmatprep.subr.mxu0 0.0
    %265 = vmatpush1.msra.mxu0 0.0
    %266 = vmatprep.subr.mxu0 0.0
    %267 = vmatpush1.msra.mxu0 0.0
    %268 = vmatprep.subr.mxu0 0.0
    %269 = vmatpush1.msra.mxu0 0.0
    %270 = vmatprep.subr.mxu0 0.0
    %271 = vmatpush1.msra.mxu0 0.0
    %272 = vmatprep.subr.mxu0 0.0
    %273 = vmatpush1.msra.mxu0 0.0
    %274 = vmatprep.subr.mxu0 0.0
    %275 = vmatpush1.msra.mxu0 0.0
    %276 = vmatprep.subr.mxu0 0.0
    %277 = vmatpush1.msra.mxu0 0.0
    %278 = vmatprep.mubr.f32.mxu0 0.0
    %279 = vmatmul.mubr.f32.gmra.mrb[0].mxu0 %v191
    %v280 = vpop.f32.mrb[0].mxu0
    %v281 = vadd.f32 0.0, %v280
    %v282 = vpop.f32.mrb[0].mxu0
    %283 = vmatprep.mubr.f32.mxu0 0.0
    %284 = vmatmul.mubr.f32.gmra.mrb[0].mxu0 %v194
    %v285 = vpop.f32.mrb[0].mxu0
    %v286 = vadd.f32 0.0, %v285
    %v287 = vpop.f32.mrb[0].mxu0
    %288 = vmatprep.mubr.f32.mxu0 0.0
    %289 = vmatmul.mubr.f32.gmra.mrb[0].mxu0 %v197
    %v290 = vpop.f32.mrb[0].mxu0
    %v291 = vadd.f32 0.0, %v290
    %v292 = vpop.f32.mrb[0].mxu0
    %293 = vmatprep.mubr.f32.mxu0 0.0
    %294 = vmatmul.mubr.f32.gmra.mrb[0].mxu0 %v200
    %v295 = vpop.f32.mrb[0].mxu0
    %v296 = vadd.f32 0.0, %v295
    %v297 = vpop.f32.mrb[0].mxu0
    %298 = vmatprep.mubr.f32.mxu0 0.0
    %299 = vmatmul.mubr.f32.gmra.mrb[0].mxu0 %v203
    %v300 = vpop.f32.mrb[0].mxu0
    %v301 = vadd.f32 0.0, %v300
    %v302 = vpop.f32.mrb[0].mxu0
    %303 = vmatprep.mubr.f32.mxu0 0.0
    %304 = vmatmul.mubr.f32.gmra.mrb[0].mxu0 %v206
    %v305 = vpop.f32.mrb[0].mxu0
    %v306 = vadd.f32 0.0, %v305
    %v307 = vpop.f32.mrb[0].mxu0
    %308 = vmatprep.mubr.f32.mxu0 0.0
    %309 = vmatmul.mubr.f32.gmra.mrb[0].mxu0 %v209
    %v310 = vpop.f32.mrb[0].mxu0
    %v311 = vadd.f32 0.0, %v310
    %v312 = vpop.f32.mrb[0].mxu0
    %313 = vmatprep.mubr.f32.mxu0 0.0
    %314 = vmatmul.mubr.f32.gmra.mrb[0].mxu0 %v212
    %v315 = vpop.f32.mrb[0].mxu0
    %v316 = vadd.f32 0.0, %v315
    %v317 = vpop.f32.mrb[0].mxu0
    %318 = vdwg.mxu0
    %v319 = vadd.f32 %v52, %v281
    %v320 = vadd.f32 %v53, %v286
    %v321 = vadd.f32 %v54, %v291
    %v322 = vadd.f32 %v55, %v296
    %v323 = vadd.f32 %v56, %v301
    %v324 = vadd.f32 %v57, %v306
    %v325 = vadd.f32 %v58, %v311
    %v326 = vadd.f32 %v59, %v316
    %v328 = vsel %vm60, %v152, 0
    %v331 = vsel %vm60, %v157, 0
    %v334 = vsel %vm60, %v162, 0
    %v337 = vsel %vm60, %v167, 0
    %v340 = vsel %vm60, %v172, 0
    %v343 = vsel %vm60, %v177, 0
    %v346 = vsel %vm60, %v182, 0
    %v349 = vsel %vm60, %v187, 0
    %351 = vmatprep.subr.mxu0 0.0
    %352 = vmatpush1.msra.mxu0 %v152
    %353 = vmatprep.subr.mxu0 0.0
    %354 = vmatpush1.msra.mxu0 %v157
    %355 = vmatprep.subr.mxu0 0.0
    %356 = vmatpush1.msra.mxu0 %v162
    %357 = vmatprep.subr.mxu0 0.0
    %358 = vmatpush1.msra.mxu0 %v167
    %359 = vmatprep.subr.mxu0 0.0
    %360 = vmatpush1.msra.mxu0 %v172
    %361 = vmatprep.subr.mxu0 0.0
    %362 = vmatpush1.msra.mxu0 %v177
    %363 = vmatprep.subr.mxu0 0.0
    %364 = vmatpush1.msra.mxu0 %v182
    %365 = vmatprep.subr.mxu0 0.0
    %366 = vmatpush1.msra.mxu0 %v187
    %367 = vmatprep.subr.mxu0 0.0
    %368 = vmatpush1.msra.mxu0 0.0
    %369 = vmatprep.subr.mxu0 0.0
    %370 = vmatpush1.msra.mxu0 0.0
    %371 = vmatprep.subr.mxu0 0.0
    %372 = vmatpush1.msra.mxu0 0.0
    %373 = vmatprep.subr.mxu0 0.0
    %374 = vmatpush1.msra.mxu0 0.0
    %375 = vmatprep.subr.mxu0 0.0
    %376 = vmatpush1.msra.mxu0 0.0
    %377 = vmatprep.subr.mxu0 0.0
    %378 = vmatpush1.msra.mxu0 0.0
    %379 = vmatprep.subr.mxu0 0.0
    %380 = vmatpush1.msra.mxu0 0.0
    %381 = vmatprep.subr.mxu0 0.0
    %382 = vmatpush1.msra.mxu0 0.0
    %383 = vmatprep.subr.mxu0 0.0
    %384 = vmatpush1.msra.mxu0 0.0
    %385 = vmatprep.subr.mxu0 0.0
    %386 = vmatpush1.msra.mxu0 0.0
    %387 = vmatprep.subr.mxu0 0.0
    %388 = vmatpush1.msra.mxu0 0.0
    %389 = vmatprep.subr.mxu0 0.0
    %390 = vmatpush1.msra.mxu0 0.0
    %391 = vmatprep.subr.mxu0 0.0
    %392 = vmatpush1.msra.mxu0 0.0
    %393 = vmatprep.subr.mxu0 0.0
    %394 = vmatpush1.msra.mxu0 0.0
    %395 = vmatprep.subr.mxu0 0.0
    %396 = vmatpush1.msra.mxu0 0.0
    %397 = vmatprep.subr.mxu0 0.0
    %398 = vmatpush1.msra.mxu0 0.0
    %399 = vmatprep.subr.mxu0 0.0
    %400 = vmatpush1.msra.mxu0 0.0
    %401 = vmatprep.subr.mxu0 0.0
    %402 = vmatpush1.msra.mxu0 0.0
    %403 = vmatprep.subr.mxu0 0.0
    %404 = vmatpush1.msra.mxu0 0.0
    %405 = vmatprep.subr.mxu0 0.0
    %406 = vmatpush1.msra.mxu0 0.0
    %407 = vmatprep.subr.mxu0 0.0
    %408 = vmatpush1.msra.mxu0 0.0
    %409 = vmatprep.subr.mxu0 0.0
    %410 = vmatpush1.msra.mxu0 0.0
    %411 = vmatprep.subr.mxu0 0.0
    %412 = vmatpush1.msra.mxu0 0.0
    %413 = vmatprep.subr.mxu0 0.0
    %414 = vmatpush1.msra.mxu0 0.0
    %415 = vmatprep.mubr.f32.mxu0 0.0
    %416 = vmatmul.mubr.f32.gmra.mrb[0].mxu0 %v328
    %v417 = vpop.f32.mrb[0].mxu0
    %v418 = vadd.f32 0.0, %v417
    %v419 = vpop.f32.mrb[0].mxu0
    %420 = vmatprep.mubr.f32.mxu0 0.0
    %421 = vmatmul.mubr.f32.gmra.mrb[0].mxu0 %v331
    %v422 = vpop.f32.mrb[0].mxu0
    %v423 = vadd.f32 0.0, %v422
    %v424 = vpop.f32.mrb[0].mxu0
    %425 = vmatprep.mubr.f32.mxu0 0.0
    %426 = vmatmul.mubr.f32.gmra.mrb[0].mxu0 %v334
    %v427 = vpop.f32.mrb[0].mxu0
    %v428 = vadd.f32 0.0, %v427
    %v429 = vpop.f32.mrb[0].mxu0
    %430 = vmatprep.mubr.f32.mxu0 0.0
    %431 = vmatmul.mubr.f32.gmra.mrb[0].mxu0 %v337
    %v432 = vpop.f32.mrb[0].mxu0
    %v433 = vadd.f32 0.0, %v432
    %v434 = vpop.f32.mrb[0].mxu0
    %435 = vmatprep.mubr.f32.mxu0 0.0
    %436 = vmatmul.mubr.f32.gmra.mrb[0].mxu0 %v340
    %v437 = vpop.f32.mrb[0].mxu0
    %v438 = vadd.f32 0.0, %v437
    %v439 = vpop.f32.mrb[0].mxu0
    %440 = vmatprep.mubr.f32.mxu0 0.0
    %441 = vmatmul.mubr.f32.gmra.mrb[0].mxu0 %v343
    %v442 = vpop.f32.mrb[0].mxu0
    %v443 = vadd.f32 0.0, %v442
    %v444 = vpop.f32.mrb[0].mxu0
    %445 = vmatprep.mubr.f32.mxu0 0.0
    %446 = vmatmul.mubr.f32.gmra.mrb[0].mxu0 %v346
    %v447 = vpop.f32.mrb[0].mxu0
    %v448 = vadd.f32 0.0, %v447
    %v449 = vpop.f32.mrb[0].mxu0
    %450 = vmatprep.mubr.f32.mxu0 0.0
    %451 = vmatmul.mubr.f32.gmra.mrb[0].mxu0 %v349
    %v452 = vpop.f32.mrb[0].mxu0
    %v453 = vadd.f32 0.0, %v452
    %v454 = vpop.f32.mrb[0].mxu0
    %455 = vdwg.mxu0
    %v457 = vsel %vm60, %v319, 0
    %v460 = vsel %vm60, %v320, 0
    %v463 = vsel %vm60, %v321, 0
    %v466 = vsel %vm60, %v322, 0
    %v469 = vsel %vm60, %v323, 0
    %v472 = vsel %vm60, %v324, 0
    %v475 = vsel %vm60, %v325, 0
    %v478 = vsel %vm60, %v326, 0
    %480 = vmatprep.subr.mxu0 0.0
    %481 = vmatpush1.msra.mxu0 %v418
    %482 = vmatprep.subr.mxu0 0.0
    %483 = vmatpush1.msra.mxu0 %v423
    %484 = vmatprep.subr.mxu0 0.0
    %485 = vmatpush1.msra.mxu0 %v428
    %486 = vmatprep.subr.mxu0 0.0
    %487 = vmatpush1.msra.mxu0 %v433
    %488 = vmatprep.subr.mxu0 0.0
    %489 = vmatpush1.msra.mxu0 %v438
    %490 = vmatprep.subr.mxu0 0.0
    %491 = vmatpush1.msra.mxu0 %v443
    %492 = vmatprep.subr.mxu0 0.0
    %493 = vmatpush1.msra.mxu0 %v448
    %494 = vmatprep.subr.mxu0 0.0
    %495 = vmatpush1.msra.mxu0 %v453
    %496 = vmatprep.subr.mxu0 0.0
    %497 = vmatpush1.msra.mxu0 0.0
    %498 = vmatprep.subr.mxu0 0.0
    %499 = vmatpush1.msra.mxu0 0.0
    %500 = vmatprep.subr.mxu0 0.0
    %501 = vmatpush1.msra.mxu0 0.0
    %502 = vmatprep.subr.mxu0 0.0
    %503 = vmatpush1.msra.mxu0 0.0
    %504 = vmatprep.subr.mxu0 0.0
    %505 = vmatpush1.msra.mxu0 0.0
    %506 = vmatprep.subr.mxu0 0.0
    %507 = vmatpush1.msra.mxu0 0.0
    %508 = vmatprep.subr.mxu0 0.0
    %509 = vmatpush1.msra.mxu0 0.0
    %510 = vmatprep.subr.mxu0 0.0
    %511 = vmatpush1.msra.mxu0 0.0
    %512 = vmatprep.subr.mxu0 0.0
    %513 = vmatpush1.msra.mxu0 0.0
    %514 = vmatprep.subr.mxu0 0.0
    %515 = vmatpush1.msra.mxu0 0.0
    %516 = vmatprep.subr.mxu0 0.0
    %517 = vmatpush1.msra.mxu0 0.0
    %518 = vmatprep.subr.mxu0 0.0
    %519 = vmatpush1.msra.mxu0 0.0
    %520 = vmatprep.subr.mxu0 0.0
    %521 = vmatpush1.msra.mxu0 0.0
    %522 = vmatprep.subr.mxu0 0.0
    %523 = vmatpush1.msra.mxu0 0.0
    %524 = vmatprep.subr.mxu0 0.0
    %525 = vmatpush1.msra.mxu0 0.0
    %526 = vmatprep.subr.mxu0 0.0
    %527 = vmatpush1.msra.mxu0 0.0
    %528 = vmatprep.subr.mxu0 0.0
    %529 = vmatpush1.msra.mxu0 0.0
    %530 = vmatprep.subr.mxu0 0.0
    %531 = vmatpush1.msra.mxu0 0.0
    %532 = vmatprep.subr.mxu0 0.0
    %533 = vmatpush1.msra.mxu0 0.0
    %534 = vmatprep.subr.mxu0 0.0
    %535 = vmatpush1.msra.mxu0 0.0
    %536 = vmatprep.subr.mxu0 0.0
    %537 = vmatpush1.msra.mxu0 0.0
    %538 = vmatprep.subr.mxu0 0.0
    %539 = vmatpush1.msra.mxu0 0.0
    %540 = vmatprep.subr.mxu0 0.0
    %541 = vmatpush1.msra.mxu0 0.0
    %542 = vmatprep.subr.mxu0 0.0
    %543 = vmatpush1.msra.mxu0 0.0
    %544 = vmatprep.mubr.f32.mxu0 0.0
    %545 = vmatmul.mubr.f32.gmra.mrb[0].mxu0 %v457
    %v546 = vpop.f32.mrb[0].mxu0
    %v547 = vadd.f32 0.0, %v546
    %v548 = vpop.f32.mrb[0].mxu0
    %549 = vmatprep.mubr.f32.mxu0 0.0
    %550 = vmatmul.mubr.f32.gmra.mrb[0].mxu0 %v460
    %v551 = vpop.f32.mrb[0].mxu0
    %v552 = vadd.f32 0.0, %v551
    %v553 = vpop.f32.mrb[0].mxu0
    %554 = vmatprep.mubr.f32.mxu0 0.0
    %555 = vmatmul.mubr.f32.gmra.mrb[0].mxu0 %v463
    %v556 = vpop.f32.mrb[0].mxu0
    %v557 = vadd.f32 0.0, %v556
    %v558 = vpop.f32.mrb[0].mxu0
    %559 = vmatprep.mubr.f32.mxu0 0.0
    %560 = vmatmul.mubr.f32.gmra.mrb[0].mxu0 %v466
    %v561 = vpop.f32.mrb[0].mxu0
    %v562 = vadd.f32 0.0, %v561
    %v563 = vpop.f32.mrb[0].mxu0
    %564 = vmatprep.mubr.f32.mxu0 0.0
    %565 = vmatmul.mubr.f32.gmra.mrb[0].mxu0 %v469
    %v566 = vpop.f32.mrb[0].mxu0
    %v567 = vadd.f32 0.0, %v566
    %v568 = vpop.f32.mrb[0].mxu0
    %569 = vmatprep.mubr.f32.mxu0 0.0
    %570 = vmatmul.mubr.f32.gmra.mrb[0].mxu0 %v472
    %v571 = vpop.f32.mrb[0].mxu0
    %v572 = vadd.f32 0.0, %v571
    %v573 = vpop.f32.mrb[0].mxu0
    %574 = vmatprep.mubr.f32.mxu0 0.0
    %575 = vmatmul.mubr.f32.gmra.mrb[0].mxu0 %v475
    %v576 = vpop.f32.mrb[0].mxu0
    %v577 = vadd.f32 0.0, %v576
    %v578 = vpop.f32.mrb[0].mxu0
    %579 = vmatprep.mubr.f32.mxu0 0.0
    %580 = vmatmul.mubr.f32.gmra.mrb[0].mxu0 %v478
    %v581 = vpop.f32.mrb[0].mxu0
    %v582 = vadd.f32 0.0, %v581
    %v583 = vpop.f32.mrb[0].mxu0
    %584 = vdwg.mxu0
    %v585 = vadd.f32 %v319, %v547
    %v586 = vadd.f32 %v320, %v552
    %v587 = vadd.f32 %v321, %v557
    %v588 = vadd.f32 %v322, %v562
    %v589 = vadd.f32 %v323, %v567
    %v590 = vadd.f32 %v324, %v572
    %v591 = vadd.f32 %v325, %v577
    %v592 = vadd.f32 %v326, %v582
    %v594 = vsel %vm60, %v418, 0
    %v597 = vsel %vm60, %v423, 0
    %v600 = vsel %vm60, %v428, 0
    %v603 = vsel %vm60, %v433, 0
    %v606 = vsel %vm60, %v438, 0
    %v609 = vsel %vm60, %v443, 0
    %v612 = vsel %vm60, %v448, 0
    %v615 = vsel %vm60, %v453, 0
    %617 = vmatprep.subr.mxu0 0.0
    %618 = vmatpush1.msra.mxu0 %v418
    %619 = vmatprep.subr.mxu0 0.0
    %620 = vmatpush1.msra.mxu0 %v423
    %621 = vmatprep.subr.mxu0 0.0
    %622 = vmatpush1.msra.mxu0 %v428
    %623 = vmatprep.subr.mxu0 0.0
    %624 = vmatpush1.msra.mxu0 %v433
    %625 = vmatprep.subr.mxu0 0.0
    %626 = vmatpush1.msra.mxu0 %v438
    %627 = vmatprep.subr.mxu0 0.0
    %628 = vmatpush1.msra.mxu0 %v443
    %629 = vmatprep.subr.mxu0 0.0
    %630 = vmatpush1.msra.mxu0 %v448
    %631 = vmatprep.subr.mxu0 0.0
    %632 = vmatpush1.msra.mxu0 %v453
    %633 = vmatprep.subr.mxu0 0.0
    %634 = vmatpush1.msra.mxu0 0.0
    %635 = vmatprep.subr.mxu0 0.0
    %636 = vmatpush1.msra.mxu0 0.0
    %637 = vmatprep.subr.mxu0 0.0
    %638 = vmatpush1.msra.mxu0 0.0
    %639 = vmatprep.subr.mxu0 0.0
    %640 = vmatpush1.msra.mxu0 0.0
    %641 = vmatprep.subr.mxu0 0.0
    %642 = vmatpush1.msra.mxu0 0.0
    %643 = vmatprep.subr.mxu0 0.0
    %644 = vmatpush1.msra.mxu0 0.0
    %645 = vmatprep.subr.mxu0 0.0
    %646 = vmatpush1.msra.mxu0 0.0
    %647 = vmatprep.subr.mxu0 0.0
    %648 = vmatpush1.msra.mxu0 0.0
    %649 = vmatprep.subr.mxu0 0.0
    %650 = vmatpush1.msra.mxu0 0.0
    %651 = vmatprep.subr.mxu0 0.0
    %652 = vmatpush1.msra.mxu0 0.0
    %653 = vmatprep.subr.mxu0 0.0
    %654 = vmatpush1.msra.mxu0 0.0
    %655 = vmatprep.subr.mxu0 0.0
    %656 = vmatpush1.msra.mxu0 0.0
    %657 = vmatprep.subr.mxu0 0.0
    %658 = vmatpush1.msra.mxu0 0.0
    %659 = vmatprep.subr.mxu0 0.0
    %660 = vmatpush1.msra.mxu0 0.0
    %661 = vmatprep.subr.mxu0 0.0
    %662 = vmatpush1.msra.mxu0 0.0
    %663 = vmatprep.subr.mxu0 0.0
    %664 = vmatpush1.msra.mxu0 0.0
    %665 = vmatprep.subr.mxu0 0.0
    %666 = vmatpush1.msra.mxu0 0.0
    %667 = vmatprep.subr.mxu0 0.0
    %668 = vmatpush1.msra.mxu0 0.0
    %669 = vmatprep.subr.mxu0 0.0
    %670 = vmatpush1.msra.mxu0 0.0
    %671 = vmatprep.subr.mxu0 0.0
    %672 = vmatpush1.msra.mxu0 0.0
    %673 = vmatprep.subr.mxu0 0.0
    %674 = vmatpush1.msra.mxu0 0.0
    %675 = vmatprep.subr.mxu0 0.0
    %676 = vmatpush1.msra.mxu0 0.0
    %677 = vmatprep.subr.mxu0 0.0
    %678 = vmatpush1.msra.mxu0 0.0
    %679 = vmatprep.subr.mxu0 0.0
    %680 = vmatpush1.msra.mxu0 0.0
    %681 = vmatprep.mubr.f32.mxu0 0.0
    %682 = vmatmul.mubr.f32.gmra.mrb[0].mxu0 %v594
    %v683 = vpop.f32.mrb[0].mxu0
    %v684 = vadd.f32 0.0, %v683
    %v685 = vpop.f32.mrb[0].mxu0
    %686 = vmatprep.mubr.f32.mxu0 0.0
    %687 = vmatmul.mubr.f32.gmra.mrb[0].mxu0 %v597
    %v688 = vpop.f32.mrb[0].mxu0
    %v689 = vadd.f32 0.0, %v688
    %v690 = vpop.f32.mrb[0].mxu0
    %691 = vmatprep.mubr.f32.mxu0 0.0
    %692 = vmatmul.mubr.f32.gmra.mrb[0].mxu0 %v600
    %v693 = vpop.f32.mrb[0].mxu0
    %v694 = vadd.f32 0.0, %v693
    %v695 = vpop.f32.mrb[0].mxu0
    %696 = vmatprep.mubr.f32.mxu0 0.0
    %697 = vmatmul.mubr.f32.gmra.mrb[0].mxu0 %v603
    %v698 = vpop.f32.mrb[0].mxu0
    %v699 = vadd.f32 0.0, %v698
    %v700 = vpop.f32.mrb[0].mxu0
    %701 = vmatprep.mubr.f32.mxu0 0.0
    %702 = vmatmul.mubr.f32.gmra.mrb[0].mxu0 %v606
    %v703 = vpop.f32.mrb[0].mxu0
    %v704 = vadd.f32 0.0, %v703
    %v705 = vpop.f32.mrb[0].mxu0
    %706 = vmatprep.mubr.f32.mxu0 0.0
    %707 = vmatmul.mubr.f32.gmra.mrb[0].mxu0 %v609
    %v708 = vpop.f32.mrb[0].mxu0
    %v709 = vadd.f32 0.0, %v708
    %v710 = vpop.f32.mrb[0].mxu0
    %711 = vmatprep.mubr.f32.mxu0 0.0
    %712 = vmatmul.mubr.f32.gmra.mrb[0].mxu0 %v612
    %v713 = vpop.f32.mrb[0].mxu0
    %v714 = vadd.f32 0.0, %v713
    %v715 = vpop.f32.mrb[0].mxu0
    %716 = vmatprep.mubr.f32.mxu0 0.0
    %717 = vmatmul.mubr.f32.gmra.mrb[0].mxu0 %v615
    %v718 = vpop.f32.mrb[0].mxu0
    %v719 = vadd.f32 0.0, %v718
    %v720 = vpop.f32.mrb[0].mxu0
    %721 = vdwg.mxu0
    %v723 = vsel %vm60, %v585, 0
    %v726 = vsel %vm60, %v586, 0
    %v729 = vsel %vm60, %v587, 0
    %v732 = vsel %vm60, %v588, 0
    %v735 = vsel %vm60, %v589, 0
    %v738 = vsel %vm60, %v590, 0
    %v741 = vsel %vm60, %v591, 0
    %v744 = vsel %vm60, %v592, 0
    %746 = vmatprep.subr.mxu0 0.0
    %747 = vmatpush1.msra.mxu0 %v684
    %748 = vmatprep.subr.mxu0 0.0
    %749 = vmatpush1.msra.mxu0 %v689
    %750 = vmatprep.subr.mxu0 0.0
    %751 = vmatpush1.msra.mxu0 %v694
    %752 = vmatprep.subr.mxu0 0.0
    %753 = vmatpush1.msra.mxu0 %v699
    %754 = vmatprep.subr.mxu0 0.0
    %755 = vmatpush1.msra.mxu0 %v704
    %756 = vmatprep.subr.mxu0 0.0
    %757 = vmatpush1.msra.mxu0 %v709
    %758 = vmatprep.subr.mxu0 0.0
    %759 = vmatpush1.msra.mxu0 %v714
    %760 = vmatprep.subr.mxu0 0.0
    %761 = vmatpush1.msra.mxu0 %v719
    %762 = vmatprep.subr.mxu0 0.0
    %763 = vmatpush1.msra.mxu0 0.0
    %764 = vmatprep.subr.mxu0 0.0
    %765 = vmatpush1.msra.mxu0 0.0
    %766 = vmatprep.subr.mxu0 0.0
    %767 = vmatpush1.msra.mxu0 0.0
    %768 = vmatprep.subr.mxu0 0.0
    %769 = vmatpush1.msra.mxu0 0.0
    %770 = vmatprep.subr.mxu0 0.0
    %771 = vmatpush1.msra.mxu0 0.0
    %772 = vmatprep.subr.mxu0 0.0
    %773 = vmatpush1.msra.mxu0 0.0
    %774 = vmatprep.subr.mxu0 0.0
    %775 = vmatpush1.msra.mxu0 0.0
    %776 = vmatprep.subr.mxu0 0.0
    %777 = vmatpush1.msra.mxu0 0.0
    %778 = vmatprep.subr.mxu0 0.0
    %779 = vmatpush1.msra.mxu0 0.0
    %780 = vmatprep.subr.mxu0 0.0
    %781 = vmatpush1.msra.mxu0 0.0
    %782 = vmatprep.subr.mxu0 0.0
    %783 = vmatpush1.msra.mxu0 0.0
    %784 = vmatprep.subr.mxu0 0.0
    %785 = vmatpush1.msra.mxu0 0.0
    %786 = vmatprep.subr.mxu0 0.0
    %787 = vmatpush1.msra.mxu0 0.0
    %788 = vmatprep.subr.mxu0 0.0
    %789 = vmatpush1.msra.mxu0 0.0
    %790 = vmatprep.subr.mxu0 0.0
    %791 = vmatpush1.msra.mxu0 0.0
    %792 = vmatprep.subr.mxu0 0.0
    %793 = vmatpush1.msra.mxu0 0.0
    %794 = vmatprep.subr.mxu0 0.0
    %795 = vmatpush1.msra.mxu0 0.0
    %796 = vmatprep.subr.mxu0 0.0
    %797 = vmatpush1.msra.mxu0 0.0
    %798 = vmatprep.subr.mxu0 0.0
    %799 = vmatpush1.msra.mxu0 0.0
    %800 = vmatprep.subr.mxu0 0.0
    %801 = vmatpush1.msra.mxu0 0.0
    %802 = vmatprep.subr.mxu0 0.0
    %803 = vmatpush1.msra.mxu0 0.0
    %804 = vmatprep.subr.mxu0 0.0
    %805 = vmatpush1.msra.mxu0 0.0
    %806 = vmatprep.subr.mxu0 0.0
    %807 = vmatpush1.msra.mxu0 0.0
    %808 = vmatprep.subr.mxu0 0.0
    %809 = vmatpush1.msra.mxu0 0.0
    %810 = vmatprep.mubr.f32.mxu0 0.0
    %811 = vmatmul.mubr.f32.gmra.mrb[0].mxu0 %v723
    %v812 = vpop.f32.mrb[0].mxu0
    %v813 = vadd.f32 0.0, %v812
    %v814 = vpop.f32.mrb[0].mxu0
    %815 = vmatprep.mubr.f32.mxu0 0.0
    %816 = vmatmul.mubr.f32.gmra.mrb[0].mxu0 %v726
    %v817 = vpop.f32.mrb[0].mxu0
    %v818 = vadd.f32 0.0, %v817
    %v819 = vpop.f32.mrb[0].mxu0
    %820 = vmatprep.mubr.f32.mxu0 0.0
    %821 = vmatmul.mubr.f32.gmra.mrb[0].mxu0 %v729
    %v822 = vpop.f32.mrb[0].mxu0
    %v823 = vadd.f32 0.0, %v822
    %v824 = vpop.f32.mrb[0].mxu0
    %825 = vmatprep.mubr.f32.mxu0 0.0
    %826 = vmatmul.mubr.f32.gmra.mrb[0].mxu0 %v732
    %v827 = vpop.f32.mrb[0].mxu0
    %v828 = vadd.f32 0.0, %v827
    %v829 = vpop.f32.mrb[0].mxu0
    %830 = vmatprep.mubr.f32.mxu0 0.0
    %831 = vmatmul.mubr.f32.gmra.mrb[0].mxu0 %v735
    %v832 = vpop.f32.mrb[0].mxu0
    %v833 = vadd.f32 0.0, %v832
    %v834 = vpop.f32.mrb[0].mxu0
    %835 = vmatprep.mubr.f32.mxu0 0.0
    %836 = vmatmul.mubr.f32.gmra.mrb[0].mxu0 %v738
    %v837 = vpop.f32.mrb[0].mxu0
    %v838 = vadd.f32 0.0, %v837
    %v839 = vpop.f32.mrb[0].mxu0
    %840 = vmatprep.mubr.f32.mxu0 0.0
    %841 = vmatmul.mubr.f32.gmra.mrb[0].mxu0 %v741
    %v842 = vpop.f32.mrb[0].mxu0
    %v843 = vadd.f32 0.0, %v842
    %v844 = vpop.f32.mrb[0].mxu0
    %845 = vmatprep.mubr.f32.mxu0 0.0
    %846 = vmatmul.mubr.f32.gmra.mrb[0].mxu0 %v744
    %v847 = vpop.f32.mrb[0].mxu0
    %v848 = vadd.f32 0.0, %v847
    %v849 = vpop.f32.mrb[0].mxu0
    %850 = vdwg.mxu0
    %v851 = vadd.f32 %v585, %v813
    %v852 = vadd.f32 %v586, %v818
    %v853 = vadd.f32 %v587, %v823
    %v854 = vadd.f32 %v588, %v828
    %v855 = vadd.f32 %v589, %v833
    %v856 = vadd.f32 %v590, %v838
    %v857 = vadd.f32 %v591, %v843
    %v858 = vadd.f32 %v592, %v848
    %v860 = vsel %vm60, %v684, 0
    %v863 = vsel %vm60, %v689, 0
    %v866 = vsel %vm60, %v694, 0
    %v869 = vsel %vm60, %v699, 0
    %v872 = vsel %vm60, %v704, 0
    %v875 = vsel %vm60, %v709, 0
    %v878 = vsel %vm60, %v714, 0
    %v881 = vsel %vm60, %v719, 0
    %883 = vmatprep.subr.mxu0 0.0
    %884 = vmatpush1.msra.mxu0 %v684
    %885 = vmatprep.subr.mxu0 0.0
    %886 = vmatpush1.msra.mxu0 %v689
    %887 = vmatprep.subr.mxu0 0.0
    %888 = vmatpush1.msra.mxu0 %v694
    %889 = vmatprep.subr.mxu0 0.0
    %890 = vmatpush1.msra.mxu0 %v699
    %891 = vmatprep.subr.mxu0 0.0
    %892 = vmatpush1.msra.mxu0 %v704
    %893 = vmatprep.subr.mxu0 0.0
    %894 = vmatpush1.msra.mxu0 %v709
    %895 = vmatprep.subr.mxu0 0.0
    %896 = vmatpush1.msra.mxu0 %v714
    %897 = vmatprep.subr.mxu0 0.0
    %898 = vmatpush1.msra.mxu0 %v719
    %899 = vmatprep.subr.mxu0 0.0
    %900 = vmatpush1.msra.mxu0 0.0
    %901 = vmatprep.subr.mxu0 0.0
    %902 = vmatpush1.msra.mxu0 0.0
    %903 = vmatprep.subr.mxu0 0.0
    %904 = vmatpush1.msra.mxu0 0.0
    %905 = vmatprep.subr.mxu0 0.0
    %906 = vmatpush1.msra.mxu0 0.0
    %907 = vmatprep.subr.mxu0 0.0
    %908 = vmatpush1.msra.mxu0 0.0
    %909 = vmatprep.subr.mxu0 0.0
    %910 = vmatpush1.msra.mxu0 0.0
    %911 = vmatprep.subr.mxu0 0.0
    %912 = vmatpush1.msra.mxu0 0.0
    %913 = vmatprep.subr.mxu0 0.0
    %914 = vmatpush1.msra.mxu0 0.0
    %915 = vmatprep.subr.mxu0 0.0
    %916 = vmatpush1.msra.mxu0 0.0
    %917 = vmatprep.subr.mxu0 0.0
    %918 = vmatpush1.msra.mxu0 0.0
    %919 = vmatprep.subr.mxu0 0.0
    %920 = vmatpush1.msra.mxu0 0.0
    %921 = vmatprep.subr.mxu0 0.0
    %922 = vmatpush1.msra.mxu0 0.0
    %923 = vmatprep.subr.mxu0 0.0
    %924 = vmatpush1.msra.mxu0 0.0
    %925 = vmatprep.subr.mxu0 0.0
    %926 = vmatpush1.msra.mxu0 0.0
    %927 = vmatprep.subr.mxu0 0.0
    %928 = vmatpush1.msra.mxu0 0.0
    %929 = vmatprep.subr.mxu0 0.0
    %930 = vmatpush1.msra.mxu0 0.0
    %931 = vmatprep.subr.mxu0 0.0
    %932 = vmatpush1.msra.mxu0 0.0
    %933 = vmatprep.subr.mxu0 0.0
    %934 = vmatpush1.msra.mxu0 0.0
    %935 = vmatprep.subr.mxu0 0.0
    %936 = vmatpush1.msra.mxu0 0.0
    %937 = vmatprep.subr.mxu0 0.0
    %938 = vmatpush1.msra.mxu0 0.0
    %939 = vmatprep.subr.mxu0 0.0
    %940 = vmatpush1.msra.mxu0 0.0
    %941 = vmatprep.subr.mxu0 0.0
    %942 = vmatpush1.msra.mxu0 0.0
    %943 = vmatprep.subr.mxu0 0.0
    %944 = vmatpush1.msra.mxu0 0.0
    %945 = vmatprep.subr.mxu0 0.0
    %946 = vmatpush1.msra.mxu0 0.0
    %947 = vmatprep.mubr.f32.mxu0 0.0
    %948 = vmatmul.mubr.f32.gmra.mrb[0].mxu0 %v860
    %v949 = vpop.f32.mrb[0].mxu0
    %v950 = vadd.f32 0.0, %v949
    %v951 = vpop.f32.mrb[0].mxu0
    %952 = vmatprep.mubr.f32.mxu0 0.0
    %953 = vmatmul.mubr.f32.gmra.mrb[0].mxu0 %v863
    %v954 = vpop.f32.mrb[0].mxu0
    %v955 = vadd.f32 0.0, %v954
    %v956 = vpop.f32.mrb[0].mxu0
    %957 = vmatprep.mubr.f32.mxu0 0.0
    %958 = vmatmul.mubr.f32.gmra.mrb[0].mxu0 %v866
    %v959 = vpop.f32.mrb[0].mxu0
    %v960 = vadd.f32 0.0, %v959
    %v961 = vpop.f32.mrb[0].mxu0
    %962 = vmatprep.mubr.f32.mxu0 0.0
    %963 = vmatmul.mubr.f32.gmra.mrb[0].mxu0 %v869
    %v964 = vpop.f32.mrb[0].mxu0
    %v965 = vadd.f32 0.0, %v964
    %v966 = vpop.f32.mrb[0].mxu0
    %967 = vmatprep.mubr.f32.mxu0 0.0
    %968 = vmatmul.mubr.f32.gmra.mrb[0].mxu0 %v872
    %v969 = vpop.f32.mrb[0].mxu0
    %v970 = vadd.f32 0.0, %v969
    %v971 = vpop.f32.mrb[0].mxu0
    %972 = vmatprep.mubr.f32.mxu0 0.0
    %973 = vmatmul.mubr.f32.gmra.mrb[0].mxu0 %v875
    %v974 = vpop.f32.mrb[0].mxu0
    %v975 = vadd.f32 0.0, %v974
    %v976 = vpop.f32.mrb[0].mxu0
    %977 = vmatprep.mubr.f32.mxu0 0.0
    %978 = vmatmul.mubr.f32.gmra.mrb[0].mxu0 %v878
    %v979 = vpop.f32.mrb[0].mxu0
    %v980 = vadd.f32 0.0, %v979
    %v981 = vpop.f32.mrb[0].mxu0
    %982 = vmatprep.mubr.f32.mxu0 0.0
    %983 = vmatmul.mubr.f32.gmra.mrb[0].mxu0 %v881
    %v984 = vpop.f32.mrb[0].mxu0
    %v985 = vadd.f32 0.0, %v984
    %v986 = vpop.f32.mrb[0].mxu0
    %987 = vdwg.mxu0
    %v989 = vsel %vm60, %v851, 0
    %v992 = vsel %vm60, %v852, 0
    %v995 = vsel %vm60, %v853, 0
    %v998 = vsel %vm60, %v854, 0
    %v1001 = vsel %vm60, %v855, 0
    %v1004 = vsel %vm60, %v856, 0
    %v1007 = vsel %vm60, %v857, 0
    %v1010 = vsel %vm60, %v858, 0
    %1012 = vmatprep.subr.mxu0 0.0
    %1013 = vmatpush1.msra.mxu0 %v950
    %1014 = vmatprep.subr.mxu0 0.0
    %1015 = vmatpush1.msra.mxu0 %v955
    %1016 = vmatprep.subr.mxu0 0.0
    %1017 = vmatpush1.msra.mxu0 %v960
    %1018 = vmatprep.subr.mxu0 0.0
    %1019 = vmatpush1.msra.mxu0 %v965
    %1020 = vmatprep.subr.mxu0 0.0
    %1021 = vmatpush1.msra.mxu0 %v970
    %1022 = vmatprep.subr.mxu0 0.0
    %1023 = vmatpush1.msra.mxu0 %v975
    %1024 = vmatprep.subr.mxu0 0.0
    %1025 = vmatpush1.msra.mxu0 %v980
    %1026 = vmatprep.subr.mxu0 0.0
    %1027 = vmatpush1.msra.mxu0 %v985
    %1028 = vmatprep.subr.mxu0 0.0
    %1029 = vmatpush1.msra.mxu0 0.0
    %1030 = vmatprep.subr.mxu0 0.0
    %1031 = vmatpush1.msra.mxu0 0.0
    %1032 = vmatprep.subr.mxu0 0.0
    %1033 = vmatpush1.msra.mxu0 0.0
    %1034 = vmatprep.subr.mxu0 0.0
    %1035 = vmatpush1.msra.mxu0 0.0
    %1036 = vmatprep.subr.mxu0 0.0
    %1037 = vmatpush1.msra.mxu0 0.0
    %1038 = vmatprep.subr.mxu0 0.0
    %1039 = vmatpush1.msra.mxu0 0.0
    %1040 = vmatprep.subr.mxu0 0.0
    %1041 = vmatpush1.msra.mxu0 0.0
    %1042 = vmatprep.subr.mxu0 0.0
    %1043 = vmatpush1.msra.mxu0 0.0
    %1044 = vmatprep.subr.mxu0 0.0
    %1045 = vmatpush1.msra.mxu0 0.0
    %1046 = vmatprep.subr.mxu0 0.0
    %1047 = vmatpush1.msra.mxu0 0.0
    %1048 = vmatprep.subr.mxu0 0.0
    %1049 = vmatpush1.msra.mxu0 0.0
    %1050 = vmatprep.subr.mxu0 0.0
    %1051 = vmatpush1.msra.mxu0 0.0
    %1052 = vmatprep.subr.mxu0 0.0
    %1053 = vmatpush1.msra.mxu0 0.0
    %1054 = vmatprep.subr.mxu0 0.0
    %1055 = vmatpush1.msra.mxu0 0.0
    %1056 = vmatprep.subr.mxu0 0.0
    %1057 = vmatpush1.msra.mxu0 0.0
    %1058 = vmatprep.subr.mxu0 0.0
    %1059 = vmatpush1.msra.mxu0 0.0
    %1060 = vmatprep.subr.mxu0 0.0
    %1061 = vmatpush1.msra.mxu0 0.0
    %1062 = vmatprep.subr.mxu0 0.0
    %1063 = vmatpush1.msra.mxu0 0.0
    %1064 = vmatprep.subr.mxu0 0.0
    %1065 = vmatpush1.msra.mxu0 0.0
    %1066 = vmatprep.subr.mxu0 0.0
    %1067 = vmatpush1.msra.mxu0 0.0
    %1068 = vmatprep.subr.mxu0 0.0
    %1069 = vmatpush1.msra.mxu0 0.0
    %1070 = vmatprep.subr.mxu0 0.0
    %1071 = vmatpush1.msra.mxu0 0.0
    %1072 = vmatprep.subr.mxu0 0.0
    %1073 = vmatpush1.msra.mxu0 0.0
    %1074 = vmatprep.subr.mxu0 0.0
    %1075 = vmatpush1.msra.mxu0 0.0
    %1076 = vmatprep.mubr.f32.mxu0 0.0
    %1077 = vmatmul.mubr.f32.gmra.mrb[0].mxu0 %v989
    %v1078 = vpop.f32.mrb[0].mxu0
    %v1079 = vadd.f32 0.0, %v1078
    %v1080 = vpop.f32.mrb[0].mxu0
    %1081 = vmatprep.mubr.f32.mxu0 0.0
    %1082 = vmatmul.mubr.f32.gmra.mrb[0].mxu0 %v992
    %v1083 = vpop.f32.mrb[0].mxu0
    %v1084 = vadd.f32 0.0, %v1083
    %v1085 = vpop.f32.mrb[0].mxu0
    %1086 = vmatprep.mubr.f32.mxu0 0.0
    %1087 = vmatmul.mubr.f32.gmra.mrb[0].mxu0 %v995
    %v1088 = vpop.f32.mrb[0].mxu0
    %v1089 = vadd.f32 0.0, %v1088
    %v1090 = vpop.f32.mrb[0].mxu0
    %1091 = vmatprep.mubr.f32.mxu0 0.0
    %1092 = vmatmul.mubr.f32.gmra.mrb[0].mxu0 %v998
    %v1093 = vpop.f32.mrb[0].mxu0
    %v1094 = vadd.f32 0.0, %v1093
    %v1095 = vpop.f32.mrb[0].mxu0
    %1096 = vmatprep.mubr.f32.mxu0 0.0
    %1097 = vmatmul.mubr.f32.gmra.mrb[0].mxu0 %v1001
    %v1098 = vpop.f32.mrb[0].mxu0
    %v1099 = vadd.f32 0.0, %v1098
    %v1100 = vpop.f32.mrb[0].mxu0
    %1101 = vmatprep.mubr.f32.mxu0 0.0
    %1102 = vmatmul.mubr.f32.gmra.mrb[0].mxu0 %v1004
    %v1103 = vpop.f32.mrb[0].mxu0
    %v1104 = vadd.f32 0.0, %v1103
    %v1105 = vpop.f32.mrb[0].mxu0
    %1106 = vmatprep.mubr.f32.mxu0 0.0
    %1107 = vmatmul.mubr.f32.gmra.mrb[0].mxu0 %v1007
    %v1108 = vpop.f32.mrb[0].mxu0
    %v1109 = vadd.f32 0.0, %v1108
    %v1110 = vpop.f32.mrb[0].mxu0
    %1111 = vmatprep.mubr.f32.mxu0 0.0
    %1112 = vmatmul.mubr.f32.gmra.mrb[0].mxu0 %v1010
    %v1113 = vpop.f32.mrb[0].mxu0
    %v1114 = vadd.f32 0.0, %v1113
    %v1115 = vpop.f32.mrb[0].mxu0
    %1116 = vdwg.mxu0
    %v1117 = vadd.f32 %v851, %v1079
    %v1118 = vadd.f32 %v852, %v1084
    %v1119 = vadd.f32 %v853, %v1089
    %v1120 = vadd.f32 %v854, %v1094
    %v1121 = vadd.f32 %v855, %v1099
    %v1122 = vadd.f32 %v856, %v1104
    %v1123 = vadd.f32 %v857, %v1109
    %v1124 = vadd.f32 %v858, %v1114
    %v1126 = vsel %vm60, %v950, 0
    %v1129 = vsel %vm60, %v955, 0
    %v1132 = vsel %vm60, %v960, 0
    %v1135 = vsel %vm60, %v965, 0
    %v1138 = vsel %vm60, %v970, 0
    %v1141 = vsel %vm60, %v975, 0
    %v1144 = vsel %vm60, %v980, 0
    %v1147 = vsel %vm60, %v985, 0
    %1149 = vmatprep.subr.mxu0 0.0
    %1150 = vmatpush1.msra.mxu0 %v950
    %1151 = vmatprep.subr.mxu0 0.0
    %1152 = vmatpush1.msra.mxu0 %v955
    %1153 = vmatprep.subr.mxu0 0.0
    %1154 = vmatpush1.msra.mxu0 %v960
    %1155 = vmatprep.subr.mxu0 0.0
    %1156 = vmatpush1.msra.mxu0 %v965
    %1157 = vmatprep.subr.mxu0 0.0
    %1158 = vmatpush1.msra.mxu0 %v970
    %1159 = vmatprep.subr.mxu0 0.0
    %1160 = vmatpush1.msra.mxu0 %v975
    %1161 = vmatprep.subr.mxu0 0.0
    %1162 = vmatpush1.msra.mxu0 %v980
    %1163 = vmatprep.subr.mxu0 0.0
    %1164 = vmatpush1.msra.mxu0 %v985
    %1165 = vmatprep.subr.mxu0 0.0
    %1166 = vmatpush1.msra.mxu0 0.0
    %1167 = vmatprep.subr.mxu0 0.0
    %1168 = vmatpush1.msra.mxu0 0.0
    %1169 = vmatprep.subr.mxu0 0.0
    %1170 = vmatpush1.msra.mxu0 0.0
    %1171 = vmatprep.subr.mxu0 0.0
    %1172 = vmatpush1.msra.mxu0 0.0
    %1173 = vmatprep.subr.mxu0 0.0
    %1174 = vmatpush1.msra.mxu0 0.0
    %1175 = vmatprep.subr.mxu0 0.0
    %1176 = vmatpush1.msra.mxu0 0.0
    %1177 = vmatprep.subr.mxu0 0.0
    %1178 = vmatpush1.msra.mxu0 0.0
    %1179 = vmatprep.subr.mxu0 0.0
    %1180 = vmatpush1.msra.mxu0 0.0
    %1181 = vmatprep.subr.mxu0 0.0
    %1182 = vmatpush1.msra.mxu0 0.0
    %1183 = vmatprep.subr.mxu0 0.0
    %1184 = vmatpush1.msra.mxu0 0.0
    %1185 = vmatprep.subr.mxu0 0.0
    %1186 = vmatpush1.msra.mxu0 0.0
    %1187 = vmatprep.subr.mxu0 0.0
    %1188 = vmatpush1.msra.mxu0 0.0
    %1189 = vmatprep.subr.mxu0 0.0
    %1190 = vmatpush1.msra.mxu0 0.0
    %1191 = vmatprep.subr.mxu0 0.0
    %1192 = vmatpush1.msra.mxu0 0.0
    %1193 = vmatprep.subr.mxu0 0.0
    %1194 = vmatpush1.msra.mxu0 0.0
    %1195 = vmatprep.subr.mxu0 0.0
    %1196 = vmatpush1.msra.mxu0 0.0
    %1197 = vmatprep.subr.mxu0 0.0
    %1198 = vmatpush1.msra.mxu0 0.0
    %1199 = vmatprep.subr.mxu0 0.0
    %1200 = vmatpush1.msra.mxu0 0.0
    %1201 = vmatprep.subr.mxu0 0.0
    %1202 = vmatpush1.msra.mxu0 0.0
    %1203 = vmatprep.subr.mxu0 0.0
    %1204 = vmatpush1.msra.mxu0 0.0
    %1205 = vmatprep.subr.mxu0 0.0
    %1206 = vmatpush1.msra.mxu0 0.0
    %1207 = vmatprep.subr.mxu0 0.0
    %1208 = vmatpush1.msra.mxu0 0.0
    %1209 = vmatprep.subr.mxu0 0.0
    %1210 = vmatpush1.msra.mxu0 0.0
    %1211 = vmatprep.subr.mxu0 0.0
    %1212 = vmatpush1.msra.mxu0 0.0
    %1213 = vmatprep.mubr.f32.mxu0 0.0
    %1214 = vmatmul.mubr.f32.gmra.mrb[0].mxu0 %v1126
    %v1215 = vpop.f32.mrb[0].mxu0
    %v1216 = vadd.f32 0.0, %v1215
    %v1217 = vpop.f32.mrb[0].mxu0
    %1218 = vmatprep.mubr.f32.mxu0 0.0
    %1219 = vmatmul.mubr.f32.gmra.mrb[0].mxu0 %v1129
    %v1220 = vpop.f32.mrb[0].mxu0
    %v1221 = vadd.f32 0.0, %v1220
    %v1222 = vpop.f32.mrb[0].mxu0
    %1223 = vmatprep.mubr.f32.mxu0 0.0
    %1224 = vmatmul.mubr.f32.gmra.mrb[0].mxu0 %v1132
    %v1225 = vpop.f32.mrb[0].mxu0
    %v1226 = vadd.f32 0.0, %v1225
    %v1227 = vpop.f32.mrb[0].mxu0
    %1228 = vmatprep.mubr.f32.mxu0 0.0
    %1229 = vmatmul.mubr.f32.gmra.mrb[0].mxu0 %v1135
    %v1230 = vpop.f32.mrb[0].mxu0
    %v1231 = vadd.f32 0.0, %v1230
    %v1232 = vpop.f32.mrb[0].mxu0
    %1233 = vmatprep.mubr.f32.mxu0 0.0
    %1234 = vmatmul.mubr.f32.gmra.mrb[0].mxu0 %v1138
    %v1235 = vpop.f32.mrb[0].mxu0
    %v1236 = vadd.f32 0.0, %v1235
    %v1237 = vpop.f32.mrb[0].mxu0
    %1238 = vmatprep.mubr.f32.mxu0 0.0
    %1239 = vmatmul.mubr.f32.gmra.mrb[0].mxu0 %v1141
    %v1240 = vpop.f32.mrb[0].mxu0
    %v1241 = vadd.f32 0.0, %v1240
    %v1242 = vpop.f32.mrb[0].mxu0
    %1243 = vmatprep.mubr.f32.mxu0 0.0
    %1244 = vmatmul.mubr.f32.gmra.mrb[0].mxu0 %v1144
    %v1245 = vpop.f32.mrb[0].mxu0
    %v1246 = vadd.f32 0.0, %v1245
    %v1247 = vpop.f32.mrb[0].mxu0
    %1248 = vmatprep.mubr.f32.mxu0 0.0
    %1249 = vmatmul.mubr.f32.gmra.mrb[0].mxu0 %v1147
    %v1250 = vpop.f32.mrb[0].mxu0
    %v1251 = vadd.f32 0.0, %v1250
    %v1252 = vpop.f32.mrb[0].mxu0
    %1253 = vdwg.mxu0
    %v1255 = vsel %vm60, %v1117, 0
    %v1258 = vsel %vm60, %v1118, 0
    %v1261 = vsel %vm60, %v1119, 0
    %v1264 = vsel %vm60, %v1120, 0
    %v1267 = vsel %vm60, %v1121, 0
    %v1270 = vsel %vm60, %v1122, 0
    %v1273 = vsel %vm60, %v1123, 0
    %v1276 = vsel %vm60, %v1124, 0
    %1278 = vmatprep.subr.mxu0 0.0
    %1279 = vmatpush1.msra.mxu0 %v1216
    %1280 = vmatprep.subr.mxu0 0.0
    %1281 = vmatpush1.msra.mxu0 %v1221
    %1282 = vmatprep.subr.mxu0 0.0
    %1283 = vmatpush1.msra.mxu0 %v1226
    %1284 = vmatprep.subr.mxu0 0.0
    %1285 = vmatpush1.msra.mxu0 %v1231
    %1286 = vmatprep.subr.mxu0 0.0
    %1287 = vmatpush1.msra.mxu0 %v1236
    %1288 = vmatprep.subr.mxu0 0.0
    %1289 = vmatpush1.msra.mxu0 %v1241
    %1290 = vmatprep.subr.mxu0 0.0
    %1291 = vmatpush1.msra.mxu0 %v1246
    %1292 = vmatprep.subr.mxu0 0.0
    %1293 = vmatpush1.msra.mxu0 %v1251
    %1294 = vmatprep.subr.mxu0 0.0
    %1295 = vmatpush1.msra.mxu0 0.0
    %1296 = vmatprep.subr.mxu0 0.0
    %1297 = vmatpush1.msra.mxu0 0.0
    %1298 = vmatprep.subr.mxu0 0.0
    %1299 = vmatpush1.msra.mxu0 0.0
    %1300 = vmatprep.subr.mxu0 0.0
    %1301 = vmatpush1.msra.mxu0 0.0
    %1302 = vmatprep.subr.mxu0 0.0
    %1303 = vmatpush1.msra.mxu0 0.0
    %1304 = vmatprep.subr.mxu0 0.0
    %1305 = vmatpush1.msra.mxu0 0.0
    %1306 = vmatprep.subr.mxu0 0.0
    %1307 = vmatpush1.msra.mxu0 0.0
    %1308 = vmatprep.subr.mxu0 0.0
    %1309 = vmatpush1.msra.mxu0 0.0
    %1310 = vmatprep.subr.mxu0 0.0
    %1311 = vmatpush1.msra.mxu0 0.0
    %1312 = vmatprep.subr.mxu0 0.0
    %1313 = vmatpush1.msra.mxu0 0.0
    %1314 = vmatprep.subr.mxu0 0.0
    %1315 = vmatpush1.msra.mxu0 0.0
    %1316 = vmatprep.subr.mxu0 0.0
    %1317 = vmatpush1.msra.mxu0 0.0
    %1318 = vmatprep.subr.mxu0 0.0
    %1319 = vmatpush1.msra.mxu0 0.0
    %1320 = vmatprep.subr.mxu0 0.0
    %1321 = vmatpush1.msra.mxu0 0.0
    %1322 = vmatprep.subr.mxu0 0.0
    %1323 = vmatpush1.msra.mxu0 0.0
    %1324 = vmatprep.subr.mxu0 0.0
    %1325 = vmatpush1.msra.mxu0 0.0
    %1326 = vmatprep.subr.mxu0 0.0
    %1327 = vmatpush1.msra.mxu0 0.0
    %1328 = vmatprep.subr.mxu0 0.0
    %1329 = vmatpush1.msra.mxu0 0.0
    %1330 = vmatprep.subr.mxu0 0.0
    %1331 = vmatpush1.msra.mxu0 0.0
    %1332 = vmatprep.subr.mxu0 0.0
    %1333 = vmatpush1.msra.mxu0 0.0
    %1334 = vmatprep.subr.mxu0 0.0
    %1335 = vmatpush1.msra.mxu0 0.0
    %1336 = vmatprep.subr.mxu0 0.0
    %1337 = vmatpush1.msra.mxu0 0.0
    %1338 = vmatprep.subr.mxu0 0.0
    %1339 = vmatpush1.msra.mxu0 0.0
    %1340 = vmatprep.subr.mxu0 0.0
    %1341 = vmatpush1.msra.mxu0 0.0
    %1342 = vmatprep.mubr.f32.mxu0 0.0
    %1343 = vmatmul.mubr.f32.gmra.mrb[0].mxu0 %v1255
    %v1344 = vpop.f32.mrb[0].mxu0
    %v1345 = vadd.f32 0.0, %v1344
    %v1346 = vpop.f32.mrb[0].mxu0
    %1347 = vmatprep.mubr.f32.mxu0 0.0
    %1348 = vmatmul.mubr.f32.gmra.mrb[0].mxu0 %v1258
    %v1349 = vpop.f32.mrb[0].mxu0
    %v1350 = vadd.f32 0.0, %v1349
    %v1351 = vpop.f32.mrb[0].mxu0
    %1352 = vmatprep.mubr.f32.mxu0 0.0
    %1353 = vmatmul.mubr.f32.gmra.mrb[0].mxu0 %v1261
    %v1354 = vpop.f32.mrb[0].mxu0
    %v1355 = vadd.f32 0.0, %v1354
    %v1356 = vpop.f32.mrb[0].mxu0
    %1357 = vmatprep.mubr.f32.mxu0 0.0
    %1358 = vmatmul.mubr.f32.gmra.mrb[0].mxu0 %v1264
    %v1359 = vpop.f32.mrb[0].mxu0
    %v1360 = vadd.f32 0.0, %v1359
    %v1361 = vpop.f32.mrb[0].mxu0
    %1362 = vmatprep.mubr.f32.mxu0 0.0
    %1363 = vmatmul.mubr.f32.gmra.mrb[0].mxu0 %v1267
    %v1364 = vpop.f32.mrb[0].mxu0
    %v1365 = vadd.f32 0.0, %v1364
    %v1366 = vpop.f32.mrb[0].mxu0
    %1367 = vmatprep.mubr.f32.mxu0 0.0
    %1368 = vmatmul.mubr.f32.gmra.mrb[0].mxu0 %v1270
    %v1369 = vpop.f32.mrb[0].mxu0
    %v1370 = vadd.f32 0.0, %v1369
    %v1371 = vpop.f32.mrb[0].mxu0
    %1372 = vmatprep.mubr.f32.mxu0 0.0
    %1373 = vmatmul.mubr.f32.gmra.mrb[0].mxu0 %v1273
    %v1374 = vpop.f32.mrb[0].mxu0
    %v1375 = vadd.f32 0.0, %v1374
    %v1376 = vpop.f32.mrb[0].mxu0
    %1377 = vmatprep.mubr.f32.mxu0 0.0
    %1378 = vmatmul.mubr.f32.gmra.mrb[0].mxu0 %v1276
    %v1379 = vpop.f32.mrb[0].mxu0
    %v1380 = vadd.f32 0.0, %v1379
    %v1381 = vpop.f32.mrb[0].mxu0
    %1382 = vdwg.mxu0
    %v1383 = vadd.f32 %v1117, %v1345
    %v1384 = vadd.f32 %v1118, %v1350
    %v1385 = vadd.f32 %v1119, %v1355
    %v1386 = vadd.f32 %v1120, %v1360
    %v1387 = vadd.f32 %v1121, %v1365
    %v1388 = vadd.f32 %v1122, %v1370
    %v1389 = vadd.f32 %v1123, %v1375
    %v1390 = vadd.f32 %v1124, %v1380
    %v1392 = vsel %vm60, %v1216, 0
    %v1395 = vsel %vm60, %v1221, 0
    %v1398 = vsel %vm60, %v1226, 0
    %v1401 = vsel %vm60, %v1231, 0
    %v1404 = vsel %vm60, %v1236, 0
    %v1407 = vsel %vm60, %v1241, 0
    %v1410 = vsel %vm60, %v1246, 0
    %v1413 = vsel %vm60, %v1251, 0
    %1415 = vmatprep.subr.mxu0 0.0
    %1416 = vmatpush1.msra.mxu0 %v1216
    %1417 = vmatprep.subr.mxu0 0.0
    %1418 = vmatpush1.msra.mxu0 %v1221
    %1419 = vmatprep.subr.mxu0 0.0
    %1420 = vmatpush1.msra.mxu0 %v1226
    %1421 = vmatprep.subr.mxu0 0.0
    %1422 = vmatpush1.msra.mxu0 %v1231
    %1423 = vmatprep.subr.mxu0 0.0
    %1424 = vmatpush1.msra.mxu0 %v1236
    %1425 = vmatprep.subr.mxu0 0.0
    %1426 = vmatpush1.msra.mxu0 %v1241
    %1427 = vmatprep.subr.mxu0 0.0
    %1428 = vmatpush1.msra.mxu0 %v1246
    %1429 = vmatprep.subr.mxu0 0.0
    %1430 = vmatpush1.msra.mxu0 %v1251
    %1431 = vmatprep.subr.mxu0 0.0
    %1432 = vmatpush1.msra.mxu0 0.0
    %1433 = vmatprep.subr.mxu0 0.0
    %1434 = vmatpush1.msra.mxu0 0.0
    %1435 = vmatprep.subr.mxu0 0.0
    %1436 = vmatpush1.msra.mxu0 0.0
    %1437 = vmatprep.subr.mxu0 0.0
    %1438 = vmatpush1.msra.mxu0 0.0
    %1439 = vmatprep.subr.mxu0 0.0
    %1440 = vmatpush1.msra.mxu0 0.0
    %1441 = vmatprep.subr.mxu0 0.0
    %1442 = vmatpush1.msra.mxu0 0.0
    %1443 = vmatprep.subr.mxu0 0.0
    %1444 = vmatpush1.msra.mxu0 0.0
    %1445 = vmatprep.subr.mxu0 0.0
    %1446 = vmatpush1.msra.mxu0 0.0
    %1447 = vmatprep.subr.mxu0 0.0
    %1448 = vmatpush1.msra.mxu0 0.0
    %1449 = vmatprep.subr.mxu0 0.0
    %1450 = vmatpush1.msra.mxu0 0.0
    %1451 = vmatprep.subr.mxu0 0.0
    %1452 = vmatpush1.msra.mxu0 0.0
    %1453 = vmatprep.subr.mxu0 0.0
    %1454 = vmatpush1.msra.mxu0 0.0
    %1455 = vmatprep.subr.mxu0 0.0
    %1456 = vmatpush1.msra.mxu0 0.0
    %1457 = vmatprep.subr.mxu0 0.0
    %1458 = vmatpush1.msra.mxu0 0.0
    %1459 = vmatprep.subr.mxu0 0.0
    %1460 = vmatpush1.msra.mxu0 0.0
    %1461 = vmatprep.subr.mxu0 0.0
    %1462 = vmatpush1.msra.mxu0 0.0
    %1463 = vmatprep.subr.mxu0 0.0
    %1464 = vmatpush1.msra.mxu0 0.0
    %1465 = vmatprep.subr.mxu0 0.0
    %1466 = vmatpush1.msra.mxu0 0.0
    %1467 = vmatprep.subr.mxu0 0.0
    %1468 = vmatpush1.msra.mxu0 0.0
    %1469 = vmatprep.subr.mxu0 0.0
    %1470 = vmatpush1.msra.mxu0 0.0
    %1471 = vmatprep.subr.mxu0 0.0
    %1472 = vmatpush1.msra.mxu0 0.0
    %1473 = vmatprep.subr.mxu0 0.0
    %1474 = vmatpush1.msra.mxu0 0.0
    %1475 = vmatprep.subr.mxu0 0.0
    %1476 = vmatpush1.msra.mxu0 0.0
    %1477 = vmatprep.subr.mxu0 0.0
    %1478 = vmatpush1.msra.mxu0 0.0
    %1479 = vmatprep.mubr.f32.mxu0 0.0
    %1480 = vmatmul.mubr.f32.gmra.mrb[0].mxu0 %v1392
    %v1481 = vpop.f32.mrb[0].mxu0
    %v1482 = vadd.f32 0.0, %v1481
    %v1483 = vpop.f32.mrb[0].mxu0
    %1484 = vmatprep.mubr.f32.mxu0 0.0
    %1485 = vmatmul.mubr.f32.gmra.mrb[0].mxu0 %v1395
    %v1486 = vpop.f32.mrb[0].mxu0
    %v1487 = vadd.f32 0.0, %v1486
    %v1488 = vpop.f32.mrb[0].mxu0
    %1489 = vmatprep.mubr.f32.mxu0 0.0
    %1490 = vmatmul.mubr.f32.gmra.mrb[0].mxu0 %v1398
    %v1491 = vpop.f32.mrb[0].mxu0
    %v1492 = vadd.f32 0.0, %v1491
    %v1493 = vpop.f32.mrb[0].mxu0
    %1494 = vmatprep.mubr.f32.mxu0 0.0
    %1495 = vmatmul.mubr.f32.gmra.mrb[0].mxu0 %v1401
    %v1496 = vpop.f32.mrb[0].mxu0
    %v1497 = vadd.f32 0.0, %v1496
    %v1498 = vpop.f32.mrb[0].mxu0
    %1499 = vmatprep.mubr.f32.mxu0 0.0
    %1500 = vmatmul.mubr.f32.gmra.mrb[0].mxu0 %v1404
    %v1501 = vpop.f32.mrb[0].mxu0
    %v1502 = vadd.f32 0.0, %v1501
    %v1503 = vpop.f32.mrb[0].mxu0
    %1504 = vmatprep.mubr.f32.mxu0 0.0
    %1505 = vmatmul.mubr.f32.gmra.mrb[0].mxu0 %v1407
    %v1506 = vpop.f32.mrb[0].mxu0
    %v1507 = vadd.f32 0.0, %v1506
    %v1508 = vpop.f32.mrb[0].mxu0
    %1509 = vmatprep.mubr.f32.mxu0 0.0
    %1510 = vmatmul.mubr.f32.gmra.mrb[0].mxu0 %v1410
    %v1511 = vpop.f32.mrb[0].mxu0
    %v1512 = vadd.f32 0.0, %v1511
    %v1513 = vpop.f32.mrb[0].mxu0
    %1514 = vmatprep.mubr.f32.mxu0 0.0
    %1515 = vmatmul.mubr.f32.gmra.mrb[0].mxu0 %v1413
    %v1516 = vpop.f32.mrb[0].mxu0
    %v1517 = vadd.f32 0.0, %v1516
    %v1518 = vpop.f32.mrb[0].mxu0
    %1519 = vdwg.mxu0
    %v1521 = vsel %vm60, %v1383, 0
    %v1524 = vsel %vm60, %v1384, 0
    %v1527 = vsel %vm60, %v1385, 0
    %v1530 = vsel %vm60, %v1386, 0
    %v1533 = vsel %vm60, %v1387, 0
    %v1536 = vsel %vm60, %v1388, 0
    %v1539 = vsel %vm60, %v1389, 0
    %v1542 = vsel %vm60, %v1390, 0
    %1544 = vmatprep.subr.mxu0 0.0
    %1545 = vmatpush1.msra.mxu0 %v1482
    %1546 = vmatprep.subr.mxu0 0.0
    %1547 = vmatpush1.msra.mxu0 %v1487
    %1548 = vmatprep.subr.mxu0 0.0
    %1549 = vmatpush1.msra.mxu0 %v1492
    %1550 = vmatprep.subr.mxu0 0.0
    %1551 = vmatpush1.msra.mxu0 %v1497
    %1552 = vmatprep.subr.mxu0 0.0
    %1553 = vmatpush1.msra.mxu0 %v1502
    %1554 = vmatprep.subr.mxu0 0.0
    %1555 = vmatpush1.msra.mxu0 %v1507
    %1556 = vmatprep.subr.mxu0 0.0
    %1557 = vmatpush1.msra.mxu0 %v1512
    %1558 = vmatprep.subr.mxu0 0.0
    %1559 = vmatpush1.msra.mxu0 %v1517
    %1560 = vmatprep.subr.mxu0 0.0
    %1561 = vmatpush1.msra.mxu0 0.0
    %1562 = vmatprep.subr.mxu0 0.0
    %1563 = vmatpush1.msra.mxu0 0.0
    %1564 = vmatprep.subr.mxu0 0.0
    %1565 = vmatpush1.msra.mxu0 0.0
    %1566 = vmatprep.subr.mxu0 0.0
    %1567 = vmatpush1.msra.mxu0 0.0
    %1568 = vmatprep.subr.mxu0 0.0
    %1569 = vmatpush1.msra.mxu0 0.0
    %1570 = vmatprep.subr.mxu0 0.0
    %1571 = vmatpush1.msra.mxu0 0.0
    %1572 = vmatprep.subr.mxu0 0.0
    %1573 = vmatpush1.msra.mxu0 0.0
    %1574 = vmatprep.subr.mxu0 0.0
    %1575 = vmatpush1.msra.mxu0 0.0
    %1576 = vmatprep.subr.mxu0 0.0
    %1577 = vmatpush1.msra.mxu0 0.0
    %1578 = vmatprep.subr.mxu0 0.0
    %1579 = vmatpush1.msra.mxu0 0.0
    %1580 = vmatprep.subr.mxu0 0.0
    %1581 = vmatpush1.msra.mxu0 0.0
    %1582 = vmatprep.subr.mxu0 0.0
    %1583 = vmatpush1.msra.mxu0 0.0
    %1584 = vmatprep.subr.mxu0 0.0
    %1585 = vmatpush1.msra.mxu0 0.0
    %1586 = vmatprep.subr.mxu0 0.0
    %1587 = vmatpush1.msra.mxu0 0.0
    %1588 = vmatprep.subr.mxu0 0.0
    %1589 = vmatpush1.msra.mxu0 0.0
    %1590 = vmatprep.subr.mxu0 0.0
    %1591 = vmatpush1.msra.mxu0 0.0
    %1592 = vmatprep.subr.mxu0 0.0
    %1593 = vmatpush1.msra.mxu0 0.0
    %1594 = vmatprep.subr.mxu0 0.0
    %1595 = vmatpush1.msra.mxu0 0.0
    %1596 = vmatprep.subr.mxu0 0.0
    %1597 = vmatpush1.msra.mxu0 0.0
    %1598 = vmatprep.subr.mxu0 0.0
    %1599 = vmatpush1.msra.mxu0 0.0
    %1600 = vmatprep.subr.mxu0 0.0
    %1601 = vmatpush1.msra.mxu0 0.0
    %1602 = vmatprep.subr.mxu0 0.0
    %1603 = vmatpush1.msra.mxu0 0.0
    %1604 = vmatprep.subr.mxu0 0.0
    %1605 = vmatpush1.msra.mxu0 0.0
    %1606 = vmatprep.subr.mxu0 0.0
    %1607 = vmatpush1.msra.mxu0 0.0
    %1608 = vmatprep.mubr.f32.mxu0 0.0
    %1609 = vmatmul.mubr.f32.gmra.mrb[0].mxu0 %v1521
    %v1610 = vpop.f32.mrb[0].mxu0
    %v1611 = vadd.f32 0.0, %v1610
    %v1612 = vpop.f32.mrb[0].mxu0
    %1613 = vmatprep.mubr.f32.mxu0 0.0
    %1614 = vmatmul.mubr.f32.gmra.mrb[0].mxu0 %v1524
    %v1615 = vpop.f32.mrb[0].mxu0
    %v1616 = vadd.f32 0.0, %v1615
    %v1617 = vpop.f32.mrb[0].mxu0
    %1618 = vmatprep.mubr.f32.mxu0 0.0
    %1619 = vmatmul.mubr.f32.gmra.mrb[0].mxu0 %v1527
    %v1620 = vpop.f32.mrb[0].mxu0
    %v1621 = vadd.f32 0.0, %v1620
    %v1622 = vpop.f32.mrb[0].mxu0
    %1623 = vmatprep.mubr.f32.mxu0 0.0
    %1624 = vmatmul.mubr.f32.gmra.mrb[0].mxu0 %v1530
    %v1625 = vpop.f32.mrb[0].mxu0
    %v1626 = vadd.f32 0.0, %v1625
    %v1627 = vpop.f32.mrb[0].mxu0
    %1628 = vmatprep.mubr.f32.mxu0 0.0
    %1629 = vmatmul.mubr.f32.gmra.mrb[0].mxu0 %v1533
    %v1630 = vpop.f32.mrb[0].mxu0
    %v1631 = vadd.f32 0.0, %v1630
    %v1632 = vpop.f32.mrb[0].mxu0
    %1633 = vmatprep.mubr.f32.mxu0 0.0
    %1634 = vmatmul.mubr.f32.gmra.mrb[0].mxu0 %v1536
    %v1635 = vpop.f32.mrb[0].mxu0
    %v1636 = vadd.f32 0.0, %v1635
    %v1637 = vpop.f32.mrb[0].mxu0
    %1638 = vmatprep.mubr.f32.mxu0 0.0
    %1639 = vmatmul.mubr.f32.gmra.mrb[0].mxu0 %v1539
    %v1640 = vpop.f32.mrb[0].mxu0
    %v1641 = vadd.f32 0.0, %v1640
    %v1642 = vpop.f32.mrb[0].mxu0
    %1643 = vmatprep.mubr.f32.mxu0 0.0
    %1644 = vmatmul.mubr.f32.gmra.mrb[0].mxu0 %v1542
    %v1645 = vpop.f32.mrb[0].mxu0
    %v1646 = vadd.f32 0.0, %v1645
    %v1647 = vpop.f32.mrb[0].mxu0
    %1648 = vdwg.mxu0
    %v1649 = vadd.f32 %v1383, %v1611
    %v1650 = vadd.f32 %v1384, %v1616
    %v1651 = vadd.f32 %v1385, %v1621
    %v1652 = vadd.f32 %v1386, %v1626
    %v1653 = vadd.f32 %v1387, %v1631
    %v1654 = vadd.f32 %v1388, %v1636
    %v1655 = vadd.f32 %v1389, %v1641
    %v1656 = vadd.f32 %v1390, %v1646
    %v1658 = vsel %vm60, %v1482, 0
    %v1661 = vsel %vm60, %v1487, 0
    %v1664 = vsel %vm60, %v1492, 0
    %v1667 = vsel %vm60, %v1497, 0
    %v1670 = vsel %vm60, %v1502, 0
    %v1673 = vsel %vm60, %v1507, 0
    %v1676 = vsel %vm60, %v1512, 0
    %v1679 = vsel %vm60, %v1517, 0
    %1681 = vmatprep.subr.mxu0 0.0
    %1682 = vmatpush1.msra.mxu0 %v1482
    %1683 = vmatprep.subr.mxu0 0.0
    %1684 = vmatpush1.msra.mxu0 %v1487
    %1685 = vmatprep.subr.mxu0 0.0
    %1686 = vmatpush1.msra.mxu0 %v1492
    %1687 = vmatprep.subr.mxu0 0.0
    %1688 = vmatpush1.msra.mxu0 %v1497
    %1689 = vmatprep.subr.mxu0 0.0
    %1690 = vmatpush1.msra.mxu0 %v1502
    %1691 = vmatprep.subr.mxu0 0.0
    %1692 = vmatpush1.msra.mxu0 %v1507
    %1693 = vmatprep.subr.mxu0 0.0
    %1694 = vmatpush1.msra.mxu0 %v1512
    %1695 = vmatprep.subr.mxu0 0.0
    %1696 = vmatpush1.msra.mxu0 %v1517
    %1697 = vmatprep.subr.mxu0 0.0
    %1698 = vmatpush1.msra.mxu0 0.0
    %1699 = vmatprep.subr.mxu0 0.0
    %1700 = vmatpush1.msra.mxu0 0.0
    %1701 = vmatprep.subr.mxu0 0.0
    %1702 = vmatpush1.msra.mxu0 0.0
    %1703 = vmatprep.subr.mxu0 0.0
    %1704 = vmatpush1.msra.mxu0 0.0
    %1705 = vmatprep.subr.mxu0 0.0
    %1706 = vmatpush1.msra.mxu0 0.0
    %1707 = vmatprep.subr.mxu0 0.0
    %1708 = vmatpush1.msra.mxu0 0.0
    %1709 = vmatprep.subr.mxu0 0.0
    %1710 = vmatpush1.msra.mxu0 0.0
    %1711 = vmatprep.subr.mxu0 0.0
    %1712 = vmatpush1.msra.mxu0 0.0
    %1713 = vmatprep.subr.mxu0 0.0
    %1714 = vmatpush1.msra.mxu0 0.0
    %1715 = vmatprep.subr.mxu0 0.0
    %1716 = vmatpush1.msra.mxu0 0.0
    %1717 = vmatprep.subr.mxu0 0.0
    %1718 = vmatpush1.msra.mxu0 0.0
    %1719 = vmatprep.subr.mxu0 0.0
    %1720 = vmatpush1.msra.mxu0 0.0
    %1721 = vmatprep.subr.mxu0 0.0
    %1722 = vmatpush1.msra.mxu0 0.0
    %1723 = vmatprep.subr.mxu0 0.0
    %1724 = vmatpush1.msra.mxu0 0.0
    %1725 = vmatprep.subr.mxu0 0.0
    %1726 = vmatpush1.msra.mxu0 0.0
    %1727 = vmatprep.subr.mxu0 0.0
    %1728 = vmatpush1.msra.mxu0 0.0
    %1729 = vmatprep.subr.mxu0 0.0
    %1730 = vmatpush1.msra.mxu0 0.0
    %1731 = vmatprep.subr.mxu0 0.0
    %1732 = vmatpush1.msra.mxu0 0.0
    %1733 = vmatprep.subr.mxu0 0.0
    %1734 = vmatpush1.msra.mxu0 0.0
    %1735 = vmatprep.subr.mxu0 0.0
    %1736 = vmatpush1.msra.mxu0 0.0
    %1737 = vmatprep.subr.mxu0 0.0
    %1738 = vmatpush1.msra.mxu0 0.0
    %1739 = vmatprep.subr.mxu0 0.0
    %1740 = vmatpush1.msra.mxu0 0.0
    %1741 = vmatprep.subr.mxu0 0.0
    %1742 = vmatpush1.msra.mxu0 0.0
    %1743 = vmatprep.subr.mxu0 0.0
    %1744 = vmatpush1.msra.mxu0 0.0
    %1745 = vmatprep.mubr.f32.mxu0 0.0
    %1746 = vmatmul.mubr.f32.gmra.mrb[0].mxu0 %v1658
    %v1747 = vpop.f32.mrb[0].mxu0
    %v1748 = vadd.f32 0.0, %v1747
    %v1749 = vpop.f32.mrb[0].mxu0
    %1750 = vmatprep.mubr.f32.mxu0 0.0
    %1751 = vmatmul.mubr.f32.gmra.mrb[0].mxu0 %v1661
    %v1752 = vpop.f32.mrb[0].mxu0
    %v1753 = vadd.f32 0.0, %v1752
    %v1754 = vpop.f32.mrb[0].mxu0
    %1755 = vmatprep.mubr.f32.mxu0 0.0
    %1756 = vmatmul.mubr.f32.gmra.mrb[0].mxu0 %v1664
    %v1757 = vpop.f32.mrb[0].mxu0
    %v1758 = vadd.f32 0.0, %v1757
    %v1759 = vpop.f32.mrb[0].mxu0
    %1760 = vmatprep.mubr.f32.mxu0 0.0
    %1761 = vmatmul.mubr.f32.gmra.mrb[0].mxu0 %v1667
    %v1762 = vpop.f32.mrb[0].mxu0
    %v1763 = vadd.f32 0.0, %v1762
    %v1764 = vpop.f32.mrb[0].mxu0
    %1765 = vmatprep.mubr.f32.mxu0 0.0
    %1766 = vmatmul.mubr.f32.gmra.mrb[0].mxu0 %v1670
    %v1767 = vpop.f32.mrb[0].mxu0
    %v1768 = vadd.f32 0.0, %v1767
    %v1769 = vpop.f32.mrb[0].mxu0
    %1770 = vmatprep.mubr.f32.mxu0 0.0
    %1771 = vmatmul.mubr.f32.gmra.mrb[0].mxu0 %v1673
    %v1772 = vpop.f32.mrb[0].mxu0
    %v1773 = vadd.f32 0.0, %v1772
    %v1774 = vpop.f32.mrb[0].mxu0
    %1775 = vmatprep.mubr.f32.mxu0 0.0
    %1776 = vmatmul.mubr.f32.gmra.mrb[0].mxu0 %v1676
    %v1777 = vpop.f32.mrb[0].mxu0
    %v1778 = vadd.f32 0.0, %v1777
    %v1779 = vpop.f32.mrb[0].mxu0
    %1780 = vmatprep.mubr.f32.mxu0 0.0
    %1781 = vmatmul.mubr.f32.gmra.mrb[0].mxu0 %v1679
    %v1782 = vpop.f32.mrb[0].mxu0
    %v1783 = vadd.f32 0.0, %v1782
    %v1784 = vpop.f32.mrb[0].mxu0
    %1785 = vdwg.mxu0
    %v1787 = vsel %vm60, %v1649, 0
    %v1790 = vsel %vm60, %v1650, 0
    %v1793 = vsel %vm60, %v1651, 0
    %v1796 = vsel %vm60, %v1652, 0
    %v1799 = vsel %vm60, %v1653, 0
    %v1802 = vsel %vm60, %v1654, 0
    %v1805 = vsel %vm60, %v1655, 0
    %v1808 = vsel %vm60, %v1656, 0
    %1810 = vmatprep.subr.mxu0 0.0
    %1811 = vmatpush1.msra.mxu0 %v1748
    %1812 = vmatprep.subr.mxu0 0.0
    %1813 = vmatpush1.msra.mxu0 %v1753
    %1814 = vmatprep.subr.mxu0 0.0
    %1815 = vmatpush1.msra.mxu0 %v1758
    %1816 = vmatprep.subr.mxu0 0.0
    %1817 = vmatpush1.msra.mxu0 %v1763
    %1818 = vmatprep.subr.mxu0 0.0
    %1819 = vmatpush1.msra.mxu0 %v1768
    %1820 = vmatprep.subr.mxu0 0.0
    %1821 = vmatpush1.msra.mxu0 %v1773
    %1822 = vmatprep.subr.mxu0 0.0
    %1823 = vmatpush1.msra.mxu0 %v1778
    %1824 = vmatprep.subr.mxu0 0.0
    %1825 = vmatpush1.msra.mxu0 %v1783
    %1826 = vmatprep.subr.mxu0 0.0
    %1827 = vmatpush1.msra.mxu0 0.0
    %1828 = vmatprep.subr.mxu0 0.0
    %1829 = vmatpush1.msra.mxu0 0.0
    %1830 = vmatprep.subr.mxu0 0.0
    %1831 = vmatpush1.msra.mxu0 0.0
    %1832 = vmatprep.subr.mxu0 0.0
    %1833 = vmatpush1.msra.mxu0 0.0
    %1834 = vmatprep.subr.mxu0 0.0
    %1835 = vmatpush1.msra.mxu0 0.0
    %1836 = vmatprep.subr.mxu0 0.0
    %1837 = vmatpush1.msra.mxu0 0.0
    %1838 = vmatprep.subr.mxu0 0.0
    %1839 = vmatpush1.msra.mxu0 0.0
    %1840 = vmatprep.subr.mxu0 0.0
    %1841 = vmatpush1.msra.mxu0 0.0
    %1842 = vmatprep.subr.mxu0 0.0
    %1843 = vmatpush1.msra.mxu0 0.0
    %1844 = vmatprep.subr.mxu0 0.0
    %1845 = vmatpush1.msra.mxu0 0.0
    %1846 = vmatprep.subr.mxu0 0.0
    %1847 = vmatpush1.msra.mxu0 0.0
    %1848 = vmatprep.subr.mxu0 0.0
    %1849 = vmatpush1.msra.mxu0 0.0
    %1850 = vmatprep.subr.mxu0 0.0
    %1851 = vmatpush1.msra.mxu0 0.0
    %1852 = vmatprep.subr.mxu0 0.0
    %1853 = vmatpush1.msra.mxu0 0.0
    %1854 = vmatprep.subr.mxu0 0.0
    %1855 = vmatpush1.msra.mxu0 0.0
    %1856 = vmatprep.subr.mxu0 0.0
    %1857 = vmatpush1.msra.mxu0 0.0
    %1858 = vmatprep.subr.mxu0 0.0
    %1859 = vmatpush1.msra.mxu0 0.0
    %1860 = vmatprep.subr.mxu0 0.0
    %1861 = vmatpush1.msra.mxu0 0.0
    %1862 = vmatprep.subr.mxu0 0.0
    %1863 = vmatpush1.msra.mxu0 0.0
    %1864 = vmatprep.subr.mxu0 0.0
    %1865 = vmatpush1.msra.mxu0 0.0
    %1866 = vmatprep.subr.mxu0 0.0
    %1867 = vmatpush1.msra.mxu0 0.0
    %1868 = vmatprep.subr.mxu0 0.0
    %1869 = vmatpush1.msra.mxu0 0.0
    %1870 = vmatprep.subr.mxu0 0.0
    %1871 = vmatpush1.msra.mxu0 0.0
    %1872 = vmatprep.subr.mxu0 0.0
    %1873 = vmatpush1.msra.mxu0 0.0
    %1874 = vmatprep.mubr.f32.mxu0 0.0
    %1875 = vmatmul.mubr.f32.gmra.mrb[0].mxu0 %v1787
    %v1876 = vpop.f32.mrb[0].mxu0
    %v1877 = vadd.f32 0.0, %v1876
    %v1878 = vpop.f32.mrb[0].mxu0
    %1879 = vmatprep.mubr.f32.mxu0 0.0
    %1880 = vmatmul.mubr.f32.gmra.mrb[0].mxu0 %v1790
    %v1881 = vpop.f32.mrb[0].mxu0
    %v1882 = vadd.f32 0.0, %v1881
    %v1883 = vpop.f32.mrb[0].mxu0
    %1884 = vmatprep.mubr.f32.mxu0 0.0
    %1885 = vmatmul.mubr.f32.gmra.mrb[0].mxu0 %v1793
    %v1886 = vpop.f32.mrb[0].mxu0
    %v1887 = vadd.f32 0.0, %v1886
    %v1888 = vpop.f32.mrb[0].mxu0
    %1889 = vmatprep.mubr.f32.mxu0 0.0
    %1890 = vmatmul.mubr.f32.gmra.mrb[0].mxu0 %v1796
    %v1891 = vpop.f32.mrb[0].mxu0
    %v1892 = vadd.f32 0.0, %v1891
    %v1893 = vpop.f32.mrb[0].mxu0
    %1894 = vmatprep.mubr.f32.mxu0 0.0
    %1895 = vmatmul.mubr.f32.gmra.mrb[0].mxu0 %v1799
    %v1896 = vpop.f32.mrb[0].mxu0
    %v1897 = vadd.f32 0.0, %v1896
    %v1898 = vpop.f32.mrb[0].mxu0
    %1899 = vmatprep.mubr.f32.mxu0 0.0
    %1900 = vmatmul.mubr.f32.gmra.mrb[0].mxu0 %v1802
    %v1901 = vpop.f32.mrb[0].mxu0
    %v1902 = vadd.f32 0.0, %v1901
    %v1903 = vpop.f32.mrb[0].mxu0
    %1904 = vmatprep.mubr.f32.mxu0 0.0
    %1905 = vmatmul.mubr.f32.gmra.mrb[0].mxu0 %v1805
    %v1906 = vpop.f32.mrb[0].mxu0
    %v1907 = vadd.f32 0.0, %v1906
    %v1908 = vpop.f32.mrb[0].mxu0
    %1909 = vmatprep.mubr.f32.mxu0 0.0
    %1910 = vmatmul.mubr.f32.gmra.mrb[0].mxu0 %v1808
    %v1911 = vpop.f32.mrb[0].mxu0
    %v1912 = vadd.f32 0.0, %v1911
    %v1913 = vpop.f32.mrb[0].mxu0
    %1914 = vdwg.mxu0
    %v1915 = vadd.f32 %v1649, %v1877
    %v1916 = vadd.f32 %v1650, %v1882
    %v1917 = vadd.f32 %v1651, %v1887
    %v1918 = vadd.f32 %v1652, %v1892
    %v1919 = vadd.f32 %v1653, %v1897
    %v1920 = vadd.f32 %v1654, %v1902
    %v1921 = vadd.f32 %v1655, %v1907
    %v1922 = vadd.f32 %v1656, %v1912
    %1923 = vst.msk [vmem:[#allocation2] sm:$0xff] %vm60, %v1915
    %1924 = vst.msk [vmem:[#allocation2 + $0x8] sm:$0xff] %vm60, %v1916
    %1925 = vst.msk [vmem:[#allocation2 + $0x10] sm:$0xff] %vm60, %v1917
    %1926 = vst.msk [vmem:[#allocation2 + $0x18] sm:$0xff] %vm60, %v1918
    %1927 = vst.msk [vmem:[#allocation2 + $0x20] sm:$0xff] %vm60, %v1919
    %1928 = vst.msk [vmem:[#allocation2 + $0x28] sm:$0xff] %vm60, %v1920
    %1929 = vst.msk [vmem:[#allocation2 + $0x30] sm:$0xff] %vm60, %v1921
    %1930 = vst.msk [vmem:[#allocation2 + $0x38] sm:$0xff] %vm60, %v1922
    // Predicated region
    $region6: #{_compute_resolvent.1} parent=1 // pred_check
      _
    $region7: #{_compute_resolvent.1} parent=1 // pred_check_branch
      %1932 = sbr.rel (0) target = $region9
    $region8: #{_compute_resolvent.1} parent=1 // pred_region
      %s1934 = ssub.s32 1024, 1024
      %1935 = vsyncadd [#allocation3], %s1934
      %s1936 = sshll.u32 [#allocation2], 4
      %s1937 = int_to_ptr.vmem [resolvable:$true] %s1936
      %1942 = dma.vmem_to_hbm [thread:$0]  %s1937, 1024, %s1, [#allocation3], 128, 128, 8
    $region9: #{_compute_resolvent.1} parent=1 // pred_fallthru
      _
    // Predicated region
    $region10: #{_compute_resolvent.1} parent=1 // pred_check
      _
    $region11: #{_compute_resolvent.1} parent=1 // pred_check_branch
      %1944 = sbr.rel (0) target = $region13
    $region12: #{_compute_resolvent.1} parent=1 // pred_region
      %1945 = dma.done [#allocation3], 1024
    $region13: #{_compute_resolvent.1} parent=1 // pred_fallthru
      _
    %1946 = vsyncpa [#allocation3], 1

</llo_original>
